<compile_context>
chip_gen: v6e
topology: v6e:2x2x1
jax: 0.10.0
libtpu: 0.0.40
codegen_flags: <defaults>
</compile_context>

<pallas_src>
import functools

import jax
import jax.numpy as jnp
from jax import lax
from jax.experimental import pallas as pl
from jax.experimental.pallas import tpu as pltpu

NEG_SLOPE = 0.01  # torch.nn.functional.leaky_relu default


def _block3d_kernel(x_ref, w_ref, wmask_ref, hmask_ref, shift_ref, o_ref, *, W):
    """One grid step = one (n, d-tile) slab in flat-spatial layout.

    x_ref:     (1, Cin, L)    L = Dt*H*W (lane-dense), activation dtype
    w_ref:     (9, Cout, Cin) 3x3 taps, tap-major (k = kh*3+kw), BN scale folded
    wmask_ref: (2, L) f32     row 0: column w-1 in bounds, row 1: column w+1
    hmask_ref: (2, L) f32     row 0: row h-1 in bounds,    row 1: row h+1
    shift_ref: (Cout, 1) f32  conv bias + BN shift, folded
    o_ref:     (1, Cout, L)   activation dtype
    """
    x = x_ref[0]                                   # (Cin, L)
    L = x.shape[-1]

    wm = wmask_ref[...]
    hm = hmask_ref[...]
    wm_l = wm[0:1] > 0.0                           # (1, L) bool
    wm_r = wm[1:2] > 0.0
    hm_u = hm[0:1] > 0.0
    hm_d = hm[1:2] > 0.0

    # Column taps (dw = -1 / +1): tap[:, s] = x[:, s + dw], zero at row edges.
    zx = jnp.zeros_like(x)
    x_l = jnp.where(wm_l, pltpu.roll(x, shift=1, axis=1), zx)            # dw = -1
    x_r = jnp.where(wm_r, pltpu.roll(x, shift=(L - 1) % L, axis=1), zx)  # dw = +1

    def row_partial(kh):
        p = jnp.dot(w_ref[kh * 3 + 0], x_l, preferred_element_type=jnp.float32)
        p = p + jnp.dot(w_ref[kh * 3 + 1], x, preferred_element_type=jnp.float32)
        p = p + jnp.dot(w_ref[kh * 3 + 2], x_r, preferred_element_type=jnp.float32)
        return p                                   # (Cout, L) f32

    p_up = row_partial(0)                          # contributes at dh = -1
    acc = row_partial(1)                           # dh = 0
    p_dn = row_partial(2)                          # contributes at dh = +1

    # Row shifts of the partial sums (+-W lanes).  Shifting by a multiple of W
    # preserves the w-coordinate, so the column masks already folded into
    # x_l / x_r remain valid; the h-mask supplies the vertical zero padding
    # and also blocks any wrap across H-rows / D-planes / ragged-tile garbage.
    zp = jnp.zeros_like(acc)
    acc = acc + jnp.where(hm_u, pltpu.roll(p_up, shift=W % L, axis=1), zp)
    acc = acc + jnp.where(hm_d, pltpu.roll(p_dn, shift=(L - W) % L, axis=1), zp)

    y = acc + shift_ref[...]                       # (Cout, 1) broadcast over lanes
    y = jnp.where(y > 0, y, NEG_SLOPE * y)         # leaky_relu
    o_ref[0] = y.astype(o_ref.dtype)


@functools.lru_cache(maxsize=None)
def _vmem_limit_bytes():
    """Generation-aware VMEM limit: min(48 MiB, half of physical VMEM)."""
    cap = 128 * 1024 * 1024
    try:
        cap = int(pltpu.get_tpu_info().vmem_capacity_bytes)
    except Exception:
        pass
    return min(48 * 1024 * 1024, cap // 2)


def _choose_d_tile(N, D, hw, Cin, Cout, itemsize, budget_bytes, min_steps=8):
    """Pick the depth-tile Dt for the flat-spatial slab.

    The flat extent Dt*H*W must be lane-aligned (multiple of 128) unless
    Dt == D (full extent).  Non-divisor tiles are allowed (pl.cdiv grid with a
    ragged, masked last step), which also covers prime D.  Preferences:
      1. fit a double-buffered-I/O + f32-live-set cost model in budget_bytes,
      2. reach >= min_steps total grid steps (DMA/compute overlap; both v7x
         TensorCores get work) -- more steps preferred until min_steps is met,
      3. keep the input block >= ~1 MiB when any fitting tile can,
      4. then the largest tile.
    """
    one_mib = 1 << 20

    def block_in_bytes(dt):
        return dt * hw * Cin * itemsize

    def step_bytes(dt):
        L = dt * hw
        io = 2 * L * (Cin + Cout) * itemsize       # double-buffered in/out blocks
        live = 4 * L * (3 * Cin + 4 * Cout)        # x + 2 taps + 3 partials + acc (f32)
        return io + live

    def steps(dt):
        return N * (-(-D // dt))

    cands = [dt for dt in range(1, D + 1) if dt == D or (dt * hw) % 128 == 0]
    fitting = [dt for dt in cands if step_bytes(dt) <= budget_bytes] or [min(cands)]

    def key(dt):
        return (min(steps(dt), min_steps), block_in_bytes(dt) >= one_mib, dt)

    return max(fitting, key=key)


@jax.jit
def block3d_forward(x_ncdhw, conv_w, conv_b, bn_gamma, bn_beta, bn_mean, bn_var,
                    eps=1e-5):
    """Pallas implementation of Block3D.forward (n_planes=1, eval-mode BN)."""
    N, Cin, D, H, W = x_ncdhw.shape
    Cout = conv_w.shape[0]
    hw = H * W
    x_dtype = x_ncdhw.dtype
    itemsize = jnp.dtype(x_dtype).itemsize

    # Fold eval-mode BatchNorm + conv bias: scale into the weights, shift as add.
    scale = bn_gamma / jnp.sqrt(bn_var + eps)                        # (Cout,)
    shift = bn_beta - bn_mean * scale + scale * conv_b               # (Cout,)
    # (Cout, Cin, 1, 3, 3) -> (9, Cout, Cin), tap-major (k = kh*3 + kw).
    w9 = jnp.transpose(conv_w.reshape(Cout, Cin, 9), (2, 0, 1))
    w9 = (w9 * scale[None, :, None]).astype(x_dtype)
    shift2 = shift.reshape(Cout, 1).astype(jnp.float32)

    # Flat-spatial view: merging trailing dims is a free (bitcast) reshape.
    # No dtype cast here: bf16 callers keep bf16 HBM traffic on v6e/v7x.
    x_flat = x_ncdhw.reshape(N, Cin, D * hw)

    vmem_limit = _vmem_limit_bytes()
    budget = max(2 * 1024 * 1024, vmem_limit // 6)
    dt = _choose_d_tile(N, D, hw, Cin, Cout, itemsize, budget)
    L = dt * hw
    grid = (N, pl.cdiv(D, dt))

    # Precomputed boundary masks (host/XLA side, no per-step div/mod chains).
    # They are periodic in hw, so one constant-index (2, L) block serves every
    # d-tile and every grid step.
    s = jnp.arange(L, dtype=jnp.int32)
    ww = s % W
    hh = (s % hw) // W
    wmask = jnp.stack([ww >= 1, ww <= W - 2]).astype(jnp.float32)    # (2, L)
    hmask = jnp.stack([hh >= 1, hh <= H - 2]).astype(jnp.float32)    # (2, L)

    kernel = functools.partial(_block3d_kernel, W=W)
    out_flat = pl.pallas_call(
        kernel,
        out_shape=jax.ShapeDtypeStruct((N, Cout, D * hw), x_dtype),
        grid=grid,
        in_specs=[
            pl.BlockSpec((1, Cin, L), lambda n, j: (n, 0, j)),
            pl.BlockSpec((9, Cout, Cin), lambda n, j: (0, 0, 0)),
            pl.BlockSpec((2, L), lambda n, j: (0, 0)),
            pl.BlockSpec((2, L), lambda n, j: (0, 0)),
            pl.BlockSpec((Cout, 1), lambda n, j: (0, 0)),
        ],
        out_specs=pl.BlockSpec((1, Cout, L), lambda n, j: (n, 0, j)),
        compiler_params=pltpu.CompilerParams(
            dimension_semantics=("parallel", "parallel"),
            vmem_limit_bytes=vmem_limit),
    )(x_flat, w9, wmask, hmask, shift2)

    return out_flat.reshape(N, Cout, D, H, W)


def block3d_reference(x_ncdhw, conv_w, conv_b, bn_gamma, bn_beta, bn_mean, bn_var,
                      eps=1e-5):
    """Pure-JAX reference mirroring the PyTorch forward (eval-mode BN)."""
    z = lax.conv_general_dilated(
        x_ncdhw, conv_w,
        window_strides=(1, 1, 1),
        padding=((0, 0), (1, 1), (1, 1)),
        dimension_numbers=("NCDHW", "OIDHW", "NCDHW"))
    z = z + conv_b[None, :, None, None, None]
    z = (z - bn_mean[None, :, None, None, None]) / jnp.sqrt(
        bn_var[None, :, None, None, None] + eps)
    z = z * bn_gamma[None, :, None, None, None] + bn_beta[None, :, None, None, None]
    return jnp.where(z > 0, z, NEG_SLOPE * z)


if __name__ == "__main__":
    key = jax.random.PRNGKey(0)
    k_x, k_w, k_b, k_g, k_be, k_m, k_v = jax.random.split(key, 7)

    N, Cin, D, H, W = 2, 4, 8, 16, 16
    Cout = 8

    x = jax.random.normal(k_x, (N, Cin, D, H, W), dtype=jnp.float32)
    conv_w = 0.1 * jax.random.normal(k_w, (Cout, Cin, 1, 3, 3), dtype=jnp.float32)
    conv_b = 0.1 * jax.random.normal(k_b, (Cout,), dtype=jnp.float32)
    bn_gamma = 1.0 + 0.1 * jax.random.normal(k_g, (Cout,), dtype=jnp.float32)
    bn_beta = 0.1 * jax.random.normal(k_be, (Cout,), dtype=jnp.float32)
    bn_mean = 0.1 * jax.random.normal(k_m, (Cout,), dtype=jnp.float32)
    bn_var = jnp.abs(jax.random.normal(k_v, (Cout,), dtype=jnp.float32)) + 0.5

    out = block3d_forward(x, conv_w, conv_b, bn_gamma, bn_beta, bn_mean, bn_var)
    out = jax.block_until_ready(out)

    ref = block3d_reference(x, conv_w, conv_b, bn_gamma, bn_beta, bn_mean, bn_var)
    assert out.shape == (N, Cout, D, H, W), out.shape
    max_err = float(jnp.max(jnp.abs(out - ref)))
    assert jnp.allclose(out, ref, atol=1e-4, rtol=1e-4), max_err

    print("KERNEL_OK")
</pallas_src>

<mosaic_0001>
module attributes {stable_mosaic.version = 11 : i64} {
  func.func @_block3d_kernel(%arg0: i32, %arg1: i32, %arg2: memref<1x4x512xf32, #tpu.memory_space<vmem>>, %arg3: memref<9x8x4xf32, #tpu.memory_space<vmem>>, %arg4: memref<2x512xf32, #tpu.memory_space<vmem>>, %arg5: memref<2x512xf32, #tpu.memory_space<vmem>>, %arg6: memref<8x1xf32, #tpu.memory_space<vmem>>, %arg7: memref<1x8x512xf32, #tpu.memory_space<vmem>>) attributes {dimension_semantics = [#tpu.dimension_semantics<parallel>, #tpu.dimension_semantics<parallel>], iteration_bounds = array<i64: 2, 4>, scalar_prefetch = 0 : i64, scratch_operands = 0 : i64, tpu.core_type = #tpu.core_type<tc>, window_params = [{transform_indices = @transform_0, window_bounds = array<i64: 1, 4, 512>}, {pipeline_mode = #tpu.pipeline_mode<synchronous>, transform_indices = @transform_1, window_bounds = array<i64: 9, 8, 4>}, {pipeline_mode = #tpu.pipeline_mode<synchronous>, transform_indices = @transform_2, window_bounds = array<i64: 2, 512>}, {pipeline_mode = #tpu.pipeline_mode<synchronous>, transform_indices = @transform_3, window_bounds = array<i64: 2, 512>}, {pipeline_mode = #tpu.pipeline_mode<synchronous>, transform_indices = @transform_4, window_bounds = array<i64: 8, 1>}, {transform_indices = @transform_5, window_bounds = array<i64: 1, 8, 512>}]} {
    %c0 = arith.constant 0 : index
    %c0_0 = arith.constant 0 : index
    %c0_1 = arith.constant 0 : index
    %0 = vector.load %arg2[%c0, %c0_0, %c0_1] : memref<1x4x512xf32, #tpu.memory_space<vmem>>, vector<1x4x512xf32>
    %1 = vector.shape_cast %0 : vector<1x4x512xf32> to vector<4x512xf32>
    %c0_2 = arith.constant 0 : index
    %c0_3 = arith.constant 0 : index
    %2 = vector.load %arg4[%c0_2, %c0_3] : memref<2x512xf32, #tpu.memory_space<vmem>>, vector<2x512xf32>
    %c0_4 = arith.constant 0 : index
    %c0_5 = arith.constant 0 : index
    %3 = vector.load %arg5[%c0_4, %c0_5] : memref<2x512xf32, #tpu.memory_space<vmem>>, vector<2x512xf32>
    %4 = vector.extract_strided_slice %2 {offsets = [0, 0], sizes = [1, 512], strides = [1, 1]} : vector<2x512xf32> to vector<1x512xf32>
    %cst = arith.constant 0.000000e+00 : f32
    %5 = vector.broadcast %cst : f32 to vector<1x512xf32>
    %6 = arith.cmpf ogt, %4, %5 : vector<1x512xf32>
    %7 = vector.extract_strided_slice %2 {offsets = [1, 0], sizes = [1, 512], strides = [1, 1]} : vector<2x512xf32> to vector<1x512xf32>
    %cst_6 = arith.constant 0.000000e+00 : f32
    %8 = vector.broadcast %cst_6 : f32 to vector<1x512xf32>
    %9 = arith.cmpf ogt, %7, %8 : vector<1x512xf32>
    %10 = vector.extract_strided_slice %3 {offsets = [0, 0], sizes = [1, 512], strides = [1, 1]} : vector<2x512xf32> to vector<1x512xf32>
    %cst_7 = arith.constant 0.000000e+00 : f32
    %11 = vector.broadcast %cst_7 : f32 to vector<1x512xf32>
    %12 = arith.cmpf ogt, %10, %11 : vector<1x512xf32>
    %13 = vector.extract_strided_slice %3 {offsets = [1, 0], sizes = [1, 512], strides = [1, 1]} : vector<2x512xf32> to vector<1x512xf32>
    %cst_8 = arith.constant 0.000000e+00 : f32
    %14 = vector.broadcast %cst_8 : f32 to vector<1x512xf32>
    %15 = arith.cmpf ogt, %13, %14 : vector<1x512xf32>
    %cst_9 = arith.constant 0.000000e+00 : f32
    %16 = vector.broadcast %cst_9 : f32 to vector<4x512xf32>
    %c1_i32 = arith.constant 1 : i32
    %17 = tpu.dynamic_rotate %1 by %c1_i32 dim 1 : vector<4x512xf32>, i32 -> vector<4x512xf32>
    %18 = vector.shape_cast %6 : vector<1x512xi1> to vector<1x512xi1>
    %19 = vector.broadcast %18 : vector<1x512xi1> to vector<4x512xi1>
    %20 = arith.select %19, %17, %16 : vector<4x512xi1>, vector<4x512xf32>
    %c511_i32 = arith.constant 511 : i32
    %21 = tpu.dynamic_rotate %1 by %c511_i32 dim 1 : vector<4x512xf32>, i32 -> vector<4x512xf32>
    %22 = vector.shape_cast %9 : vector<1x512xi1> to vector<1x512xi1>
    %23 = vector.broadcast %22 : vector<1x512xi1> to vector<4x512xi1>
    %24 = arith.select %23, %21, %16 : vector<4x512xi1>, vector<4x512xf32>
    %c0_10 = arith.constant 0 : index
    %c0_11 = arith.constant 0 : index
    %c0_12 = arith.constant 0 : index
    %25 = vector.load %arg3[%c0_10, %c0_11, %c0_12] : memref<9x8x4xf32, #tpu.memory_space<vmem>>, vector<1x8x4xf32>
    %26 = vector.shape_cast %25 : vector<1x8x4xf32> to vector<8x4xf32>
    %cst_13 = arith.constant dense<0.000000e+00> : vector<8x512xf32>
    %27 = tpu.matmul %26, %20, %cst_13 {dimension_numbers = #tpu.dot_dimension_numbers<[1], [0], [0], [1], [0, 0, 1, 1], [], []>} : vector<8x4xf32>, vector<4x512xf32>, vector<8x512xf32> -> vector<8x512xf32>
    %c1 = arith.constant 1 : index
    %c0_14 = arith.constant 0 : index
    %c0_15 = arith.constant 0 : index
    %28 = vector.load %arg3[%c1, %c0_14, %c0_15] : memref<9x8x4xf32, #tpu.memory_space<vmem>>, vector<1x8x4xf32>
    %29 = vector.shape_cast %28 : vector<1x8x4xf32> to vector<8x4xf32>
    %cst_16 = arith.constant dense<0.000000e+00> : vector<8x512xf32>
    %30 = tpu.matmul %29, %1, %cst_16 {dimension_numbers = #tpu.dot_dimension_numbers<[1], [0], [0], [1], [0, 0, 1, 1], [], []>} : vector<8x4xf32>, vector<4x512xf32>, vector<8x512xf32> -> vector<8x512xf32>
    %31 = arith.addf %27, %30 : vector<8x512xf32>
    %c2 = arith.constant 2 : index
    %c0_17 = arith.constant 0 : index
    %c0_18 = arith.constant 0 : index
    %32 = vector.load %arg3[%c2, %c0_17, %c0_18] : memref<9x8x4xf32, #tpu.memory_space<vmem>>, vector<1x8x4xf32>
    %33 = vector.shape_cast %32 : vector<1x8x4xf32> to vector<8x4xf32>
    %cst_19 = arith.constant dense<0.000000e+00> : vector<8x512xf32>
    %34 = tpu.matmul %33, %24, %cst_19 {dimension_numbers = #tpu.dot_dimension_numbers<[1], [0], [0], [1], [0, 0, 1, 1], [], []>} : vector<8x4xf32>, vector<4x512xf32>, vector<8x512xf32> -> vector<8x512xf32>
    %35 = arith.addf %31, %34 : vector<8x512xf32>
    %c3 = arith.constant 3 : index
    %c0_20 = arith.constant 0 : index
    %c0_21 = arith.constant 0 : index
    %36 = vector.load %arg3[%c3, %c0_20, %c0_21] : memref<9x8x4xf32, #tpu.memory_space<vmem>>, vector<1x8x4xf32>
    %37 = vector.shape_cast %36 : vector<1x8x4xf32> to vector<8x4xf32>
    %cst_22 = arith.constant dense<0.000000e+00> : vector<8x512xf32>
    %38 = tpu.matmul %37, %20, %cst_22 {dimension_numbers = #tpu.dot_dimension_numbers<[1], [0], [0], [1], [0, 0, 1, 1], [], []>} : vector<8x4xf32>, vector<4x512xf32>, vector<8x512xf32> -> vector<8x512xf32>
    %c4 = arith.constant 4 : index
    %c0_23 = arith.constant 0 : index
    %c0_24 = arith.constant 0 : index
    %39 = vector.load %arg3[%c4, %c0_23, %c0_24] : memref<9x8x4xf32, #tpu.memory_space<vmem>>, vector<1x8x4xf32>
    %40 = vector.shape_cast %39 : vector<1x8x4xf32> to vector<8x4xf32>
    %cst_25 = arith.constant dense<0.000000e+00> : vector<8x512xf32>
    %41 = tpu.matmul %40, %1, %cst_25 {dimension_numbers = #tpu.dot_dimension_numbers<[1], [0], [0], [1], [0, 0, 1, 1], [], []>} : vector<8x4xf32>, vector<4x512xf32>, vector<8x512xf32> -> vector<8x512xf32>
    %42 = arith.addf %38, %41 : vector<8x512xf32>
    %c5 = arith.constant 5 : index
    %c0_26 = arith.constant 0 : index
    %c0_27 = arith.constant 0 : index
    %43 = vector.load %arg3[%c5, %c0_26, %c0_27] : memref<9x8x4xf32, #tpu.memory_space<vmem>>, vector<1x8x4xf32>
    %44 = vector.shape_cast %43 : vector<1x8x4xf32> to vector<8x4xf32>
    %cst_28 = arith.constant dense<0.000000e+00> : vector<8x512xf32>
    %45 = tpu.matmul %44, %24, %cst_28 {dimension_numbers = #tpu.dot_dimension_numbers<[1], [0], [0], [1], [0, 0, 1, 1], [], []>} : vector<8x4xf32>, vector<4x512xf32>, vector<8x512xf32> -> vector<8x512xf32>
    %46 = arith.addf %42, %45 : vector<8x512xf32>
    %c6 = arith.constant 6 : index
    %c0_29 = arith.constant 0 : index
    %c0_30 = arith.constant 0 : index
    %47 = vector.load %arg3[%c6, %c0_29, %c0_30] : memref<9x8x4xf32, #tpu.memory_space<vmem>>, vector<1x8x4xf32>
    %48 = vector.shape_cast %47 : vector<1x8x4xf32> to vector<8x4xf32>
    %cst_31 = arith.constant dense<0.000000e+00> : vector<8x512xf32>
    %49 = tpu.matmul %48, %20, %cst_31 {dimension_numbers = #tpu.dot_dimension_numbers<[1], [0], [0], [1], [0, 0, 1, 1], [], []>} : vector<8x4xf32>, vector<4x512xf32>, vector<8x512xf32> -> vector<8x512xf32>
    %c7 = arith.constant 7 : index
    %c0_32 = arith.constant 0 : index
    %c0_33 = arith.constant 0 : index
    %50 = vector.load %arg3[%c7, %c0_32, %c0_33] : memref<9x8x4xf32, #tpu.memory_space<vmem>>, vector<1x8x4xf32>
    %51 = vector.shape_cast %50 : vector<1x8x4xf32> to vector<8x4xf32>
    %cst_34 = arith.constant dense<0.000000e+00> : vector<8x512xf32>
    %52 = tpu.matmul %51, %1, %cst_34 {dimension_numbers = #tpu.dot_dimension_numbers<[1], [0], [0], [1], [0, 0, 1, 1], [], []>} : vector<8x4xf32>, vector<4x512xf32>, vector<8x512xf32> -> vector<8x512xf32>
    %53 = arith.addf %49, %52 : vector<8x512xf32>
    %c8 = arith.constant 8 : index
    %c0_35 = arith.constant 0 : index
    %c0_36 = arith.constant 0 : index
    %54 = vector.load %arg3[%c8, %c0_35, %c0_36] : memref<9x8x4xf32, #tpu.memory_space<vmem>>, vector<1x8x4xf32>
    %55 = vector.shape_cast %54 : vector<1x8x4xf32> to vector<8x4xf32>
    %cst_37 = arith.constant dense<0.000000e+00> : vector<8x512xf32>
    %56 = tpu.matmul %55, %24, %cst_37 {dimension_numbers = #tpu.dot_dimension_numbers<[1], [0], [0], [1], [0, 0, 1, 1], [], []>} : vector<8x4xf32>, vector<4x512xf32>, vector<8x512xf32> -> vector<8x512xf32>
    %57 = arith.addf %53, %56 : vector<8x512xf32>
    %cst_38 = arith.constant 0.000000e+00 : f32
    %58 = vector.broadcast %cst_38 : f32 to vector<8x512xf32>
    %c16_i32 = arith.constant 16 : i32
    %59 = tpu.dynamic_rotate %35 by %c16_i32 dim 1 : vector<8x512xf32>, i32 -> vector<8x512xf32>
    %60 = vector.shape_cast %12 : vector<1x512xi1> to vector<1x512xi1>
    %61 = vector.broadcast %60 : vector<1x512xi1> to vector<8x512xi1>
    %62 = arith.select %61, %59, %58 : vector<8x512xi1>, vector<8x512xf32>
    %63 = arith.addf %46, %62 : vector<8x512xf32>
    %c496_i32 = arith.constant 496 : i32
    %64 = tpu.dynamic_rotate %57 by %c496_i32 dim 1 : vector<8x512xf32>, i32 -> vector<8x512xf32>
    %65 = vector.shape_cast %15 : vector<1x512xi1> to vector<1x512xi1>
    %66 = vector.broadcast %65 : vector<1x512xi1> to vector<8x512xi1>
    %67 = arith.select %66, %64, %58 : vector<8x512xi1>, vector<8x512xf32>
    %68 = arith.addf %63, %67 : vector<8x512xf32>
    %c0_39 = arith.constant 0 : index
    %c0_40 = arith.constant 0 : index
    %69 = vector.load %arg6[%c0_39, %c0_40] : memref<8x1xf32, #tpu.memory_space<vmem>>, vector<8x1xf32>
    %70 = vector.broadcast %69 : vector<8x1xf32> to vector<8x512xf32>
    %71 = arith.addf %68, %70 : vector<8x512xf32>
    %cst_41 = arith.constant 0.000000e+00 : f32
    %72 = vector.broadcast %cst_41 : f32 to vector<8x512xf32>
    %73 = arith.cmpf ogt, %71, %72 : vector<8x512xf32>
    %cst_42 = arith.constant 0.00999999977 : f32
    %74 = vector.broadcast %cst_42 : f32 to vector<8x512xf32>
    %75 = arith.mulf %74, %71 : vector<8x512xf32>
    %76 = arith.select %73, %71, %75 : vector<8x512xi1>, vector<8x512xf32>
    %c0_43 = arith.constant 0 : index
    %c0_44 = arith.constant 0 : index
    %c0_45 = arith.constant 0 : index
    %77 = vector.load %arg7[%c0_43, %c0_44, %c0_45] : memref<1x8x512xf32, #tpu.memory_space<vmem>>, vector<1x8x512xf32>
    %78 = vector.shape_cast %77 : vector<1x8x512xf32> to vector<8x512xf32>
    %79 = vector.shape_cast %76 : vector<8x512xf32> to vector<1x8x512xf32>
    tpu.vector_store %arg7[%c0_43, %c0_44, %c0_45], %79 {strides = array<i32>} : memref<1x8x512xf32, #tpu.memory_space<vmem>>, vector<1x8x512xf32>,
    return
  }
  func.func @transform_0(%arg0: i32, %arg1: i32) -> (i32, i32, i32) {
    %c0_i32 = arith.constant 0 : i32
    %c0_i32_0 = arith.constant 0 : i32
    return %arg0, %c0_i32, %arg1 : i32, i32, i32
  }
  func.func @transform_1(%arg0: i32, %arg1: i32) -> (i32, i32, i32) {
    %c0_i32 = arith.constant 0 : i32
    %c0_i32_0 = arith.constant 0 : i32
    %c0_i32_1 = arith.constant 0 : i32
    %c0_i32_2 = arith.constant 0 : i32
    return %c0_i32, %c0_i32_0, %c0_i32_1 : i32, i32, i32
  }
  func.func @transform_2(%arg0: i32, %arg1: i32) -> (i32, i32) {
    %c0_i32 = arith.constant 0 : i32
    %c0_i32_0 = arith.constant 0 : i32
    %c0_i32_1 = arith.constant 0 : i32
    return %c0_i32, %c0_i32_0 : i32, i32
  }
  func.func @transform_3(%arg0: i32, %arg1: i32) -> (i32, i32) {
    %c0_i32 = arith.constant 0 : i32
    %c0_i32_0 = arith.constant 0 : i32
    %c0_i32_1 = arith.constant 0 : i32
    return %c0_i32, %c0_i32_0 : i32, i32
  }
  func.func @transform_4(%arg0: i32, %arg1: i32) -> (i32, i32) {
    %c0_i32 = arith.constant 0 : i32
    %c0_i32_0 = arith.constant 0 : i32
    %c0_i32_1 = arith.constant 0 : i32
    return %c0_i32, %c0_i32_0 : i32, i32
  }
  func.func @transform_5(%arg0: i32, %arg1: i32) -> (i32, i32, i32) {
    %c0_i32 = arith.constant 0 : i32
    %c0_i32_0 = arith.constant 0 : i32
    return %arg0, %c0_i32, %arg1 : i32, i32, i32
  }
}

</mosaic_0001>

<llo_original>
// kernel: block3d_forward.1
$region0: #{block3d_forward.1}
  #allocation0 [shape = 'u32[]', space=smem, size = 0x4, offset = 0x4, fixed_abs, tag = 'smem constant byte address 0x4 - core index']
  #allocation1 [shape = 'u32[144,128]{1,0:T(1,128)}', space=vmem, size = 0x12000, scoped, tag = 'internal scratch']
  %s0 = inlined_call_operand.vmem [shape: f32[2,4,2048], index: 0, kind: input, shape index: {}]
  %s1 = inlined_call_operand.vmem [shape: f32[9,8,4], index: 1, kind: input, shape index: {}]
  %s2 = inlined_call_operand.vmem [shape: f32[2,512], index: 2, kind: input, shape index: {}]
  %s3 = inlined_call_operand.vmem [shape: f32[2,512], index: 3, kind: input, shape index: {}]
  %s4 = inlined_call_operand.vmem [shape: f32[8,1], index: 4, kind: input, shape index: {}]
  %s5 = inlined_call_operand.vmem [shape: f32[2,8,2048], index: 5, kind: output, shape index: {}]
  %s6 = sld [smem:[#allocation0]]
  $region53: #{block3d_forward.1} parent=0
    _
  %s8 = ssub.s32 1, %s6
  %s9 = scalar_select 0, %s8, %s6
  loop: start=0, step=1, limit=10
  $region2: #{block3d_forward.1} parent=0 // loop_pre_header
    _
  $region3: #{block3d_forward.1} parent=0 // loop_header
    %s11 = sphi 0, %s15
    %p12 = scmp.ge.s32.totalorder %s11, 10
    %s18 = sphi 0, %s30
    %s19 = sphi 0, %s26
    %s20 = sphi 0, %s18
    %s21 = sphi 0, %s19
    %s22 = sphi 0, %s20
    %s23 = sphi 0, %s21
    %s35 = sphi 0, %s37
    %s38 = sphi 0, %s35
    %s39 = sphi 0, %s38
    %s55 = sphi 0, %s39
    %s59 = sphi 0, %s59
    %s61 = sphi 0, %s59
    %s62 = sphi 0, %s61
    %s76 = sphi 0, %s62
    %s80 = sphi 0, %s80
    %s82 = sphi 0, %s80
    %s83 = sphi 0, %s82
    %s97 = sphi 0, %s83
    %s101 = sphi 0, %s101
    %s103 = sphi 0, %s101
    %s104 = sphi 0, %s103
    %s118 = sphi 0, %s104
    %s122 = sphi 0, %s122
    %s124 = sphi 0, %s122
    %s125 = sphi 0, %s124
    %s139 = sphi 0, %s125
    %s147 = sphi 0, %s149
    %s150 = sphi 0, %s147
    %s151 = sphi 0, %s150
    %s167 = sphi 0, %s151
  $region4: #{block3d_forward.1} parent=0 // loop_header_branch
    %14 = sbr.rel (%p12) target = $region8
  $region5: #{block3d_forward.1} parent=0 // loop_body
    %s16 = ssub.s32 %s11, 1
    %s17 = ssub.s32 %s11, 2
    %s24 = sadd.s32 1, %s19
    %p25 = scmp.ge.s32.totalorder %s24, 4
    %s26 = scalar_select %p25, 0, %s24
    %s27 = sadd.s32 1, %s18
    %s28 = scalar_select %p25, %s27, %s18
    %p29 = scmp.ge.s32.totalorder %s28, 2
    %s30 = scalar_select %p29, 0, %s28
    %s31 = ssub.s32 %s18, %s30
    %s32 = ssub.s32 %s19, %s26
    %s33 = sor.u32 %s31, %s32
    %p34 = scmp.eq.s32.totalorder %s33, 0
    %s36 = sadd.s32 %s35, 1
    %s37 = scalar_select %p34, %s35, %s36
    %p40 = pneg %p34
    %p41 = scmp.eq.s32.totalorder %s11, 7
    %p42 = por %p40, %p41
    %p43 = scmp.ne.s32.totalorder %s35, %s38
    %p44 = scmp.eq.s32.totalorder %s11, 0
    %p45 = por %p43, %p44
    %p46 = scmp.ne.s32.totalorder %s35, %s38
    %p47 = scmp.eq.s32.totalorder %s16, 7
    %p48 = por %p46, %p47
    %p49 = scmp.ne.s32.totalorder %s38, %s39
    %p50 = scmp.eq.s32.totalorder %s16, 0
    %p51 = por %p49, %p50
    %p52 = scmp.ne.s32.totalorder %s38, %s39
    %p53 = scmp.eq.s32.totalorder %s17, 7
    %p54 = por %p52, %p53
    %p56 = scmp.ne.s32.totalorder %s39, %s55
    %p57 = scmp.eq.s32.totalorder %s17, 0
    %p58 = por %p56, %p57
    %s60 = sadd.s32 %s59, 1
    %p63 = scmp.eq.s32.totalorder %s11, 7
    %p64 = scmp.ne.s32.totalorder %s59, %s61
    %p65 = scmp.eq.s32.totalorder %s11, 0
    %p66 = por %p64, %p65
    %p67 = scmp.ne.s32.totalorder %s59, %s61
    %p68 = scmp.eq.s32.totalorder %s16, 7
    %p69 = por %p67, %p68
    %p70 = scmp.ne.s32.totalorder %s61, %s62
    %p71 = scmp.eq.s32.totalorder %s16, 0
    %p72 = por %p70, %p71
    %p73 = scmp.ne.s32.totalorder %s61, %s62
    %p74 = scmp.eq.s32.totalorder %s17, 7
    %p75 = por %p73, %p74
    %p77 = scmp.ne.s32.totalorder %s62, %s76
    %p78 = scmp.eq.s32.totalorder %s17, 0
    %p79 = por %p77, %p78
    %s81 = sadd.s32 %s80, 1
    %p84 = scmp.eq.s32.totalorder %s11, 7
    %p85 = scmp.ne.s32.totalorder %s80, %s82
    %p86 = scmp.eq.s32.totalorder %s11, 0
    %p87 = por %p85, %p86
    %p88 = scmp.ne.s32.totalorder %s80, %s82
    %p89 = scmp.eq.s32.totalorder %s16, 7
    %p90 = por %p88, %p89
    %p91 = scmp.ne.s32.totalorder %s82, %s83
    %p92 = scmp.eq.s32.totalorder %s16, 0
    %p93 = por %p91, %p92
    %p94 = scmp.ne.s32.totalorder %s82, %s83
    %p95 = scmp.eq.s32.totalorder %s17, 7
    %p96 = por %p94, %p95
    %p98 = scmp.ne.s32.totalorder %s83, %s97
    %p99 = scmp.eq.s32.totalorder %s17, 0
    %p100 = por %p98, %p99
    %s102 = sadd.s32 %s101, 1
    %p105 = scmp.eq.s32.totalorder %s11, 7
    %p106 = scmp.ne.s32.totalorder %s101, %s103
    %p107 = scmp.eq.s32.totalorder %s11, 0
    %p108 = por %p106, %p107
    %p109 = scmp.ne.s32.totalorder %s101, %s103
    %p110 = scmp.eq.s32.totalorder %s16, 7
    %p111 = por %p109, %p110
    %p112 = scmp.ne.s32.totalorder %s103, %s104
    %p113 = scmp.eq.s32.totalorder %s16, 0
    %p114 = por %p112, %p113
    %p115 = scmp.ne.s32.totalorder %s103, %s104
    %p116 = scmp.eq.s32.totalorder %s17, 7
    %p117 = por %p115, %p116
    %p119 = scmp.ne.s32.totalorder %s104, %s118
    %p120 = scmp.eq.s32.totalorder %s17, 0
    %p121 = por %p119, %p120
    %s123 = sadd.s32 %s122, 1
    %p126 = scmp.eq.s32.totalorder %s11, 7
    %p127 = scmp.ne.s32.totalorder %s122, %s124
    %p128 = scmp.eq.s32.totalorder %s11, 0
    %p129 = por %p127, %p128
    %p130 = scmp.ne.s32.totalorder %s122, %s124
    %p131 = scmp.eq.s32.totalorder %s16, 7
    %p132 = por %p130, %p131
    %p133 = scmp.ne.s32.totalorder %s124, %s125
    %p134 = scmp.eq.s32.totalorder %s16, 0
    %p135 = por %p133, %p134
    %p136 = scmp.ne.s32.totalorder %s124, %s125
    %p137 = scmp.eq.s32.totalorder %s17, 7
    %p138 = por %p136, %p137
    %p140 = scmp.ne.s32.totalorder %s125, %s139
    %p141 = scmp.eq.s32.totalorder %s17, 0
    %p142 = por %p140, %p141
    %s143 = ssub.s32 %s18, %s30
    %s144 = ssub.s32 %s19, %s26
    %s145 = sor.u32 %s143, %s144
    %p146 = scmp.eq.s32.totalorder %s145, 0
    %s148 = sadd.s32 %s147, 1
    %s149 = scalar_select %p146, %s147, %s148
    %p152 = pneg %p146
    %p153 = scmp.eq.s32.totalorder %s11, 7
    %p154 = por %p152, %p153
    %p155 = scmp.ne.s32.totalorder %s147, %s150
    %p156 = scmp.eq.s32.totalorder %s11, 0
    %p157 = por %p155, %p156
    %p158 = scmp.ne.s32.totalorder %s147, %s150
    %p159 = scmp.eq.s32.totalorder %s16, 7
    %p160 = por %p158, %p159
    %p161 = scmp.ne.s32.totalorder %s150, %s151
    %p162 = scmp.eq.s32.totalorder %s16, 0
    %p163 = por %p161, %p162
    %p164 = scmp.ne.s32.totalorder %s150, %s151
    %p165 = scmp.eq.s32.totalorder %s17, 7
    %p166 = por %p164, %p165
    %p168 = scmp.ne.s32.totalorder %s151, %s167
    %p169 = scmp.eq.s32.totalorder %s17, 0
    %p170 = por %p168, %p169
    %p171 = scmp.le.s32.totalorder 1, %s11
    %p172 = scmp.lt.s32.totalorder %s11, 9
    %p173 = pnand %p171, %p172
    %p174 = pneg %p173
    // Predicated region
    $region9: #{block3d_forward.1} parent=5 // pred_check
      _
    $region10: #{block3d_forward.1} parent=5 // pred_check_branch
      %176 = sbr.rel (%p173) target = $region12
    $region11: #{block3d_forward.1} parent=5 // pred_region
      %s177 = ssub.s32 %s11, 1
      // Predicated region
      $region13: #{block3d_forward.1} parent=11 // pred_check
        %p178 = pneg %p72
      $region14: #{block3d_forward.1} parent=11 // pred_check_branch
        %180 = sbr.rel (%p178) target = $region16
      $region15: #{block3d_forward.1} parent=11 // pred_region
        _
      $region16: #{block3d_forward.1} parent=11 // pred_fallthru
        _
      // Predicated region
      $region17: #{block3d_forward.1} parent=11 // pred_check
        %p181 = pneg %p93
      $region18: #{block3d_forward.1} parent=11 // pred_check_branch
        %183 = sbr.rel (%p181) target = $region20
      $region19: #{block3d_forward.1} parent=11 // pred_region
        _
      $region20: #{block3d_forward.1} parent=11 // pred_fallthru
        _
      // Predicated region
      $region21: #{block3d_forward.1} parent=11 // pred_check
        %p184 = pneg %p114
      $region22: #{block3d_forward.1} parent=11 // pred_check_branch
        %186 = sbr.rel (%p184) target = $region24
      $region23: #{block3d_forward.1} parent=11 // pred_region
        _
      $region24: #{block3d_forward.1} parent=11 // pred_fallthru
        _
      // Predicated region
      $region25: #{block3d_forward.1} parent=11 // pred_check
        %p187 = pneg %p135
      $region26: #{block3d_forward.1} parent=11 // pred_check_branch
        %189 = sbr.rel (%p187) target = $region28
      $region27: #{block3d_forward.1} parent=11 // pred_region
        _
      $region28: #{block3d_forward.1} parent=11 // pred_fallthru
        _
    $region12: #{block3d_forward.1} parent=5 // pred_fallthru
      _
    %p190 = scmp.lt.s32.totalorder %s11, 8
    // Predicated region
    $region29: #{block3d_forward.1} parent=5 // pred_check
      %p191 = pneg %p190
    $region30: #{block3d_forward.1} parent=5 // pred_check_branch
      %193 = sbr.rel (%p191) target = $region32
    $region31: #{block3d_forward.1} parent=5 // pred_region
      // Predicated region
      $region33: #{block3d_forward.1} parent=31 // pred_check
        %p194 = pneg %p45
      $region34: #{block3d_forward.1} parent=31 // pred_check_branch
        %196 = sbr.rel (%p194) target = $region36
      $region35: #{block3d_forward.1} parent=31 // pred_region
        %s197 = smul.u32 4, %s19
        %p198 = scmp.lt.s32.totalorder %s18, 1
        %s199 = scalar_select %p198, %s18, 1
        %p200 = scmp.lt.s32.totalorder %s197, 15
        %s201 = scalar_select %p200, %s197, 15
        %s202 = smul.addr %s199, 16
        %s203 = sadd.s32 %s201, %s202
        %s204 = smul.addr %s203, 4
        %s205 = scalar_lea.vmem %s0, %s204
        %s206 = smul.u32 4, %s19
      $region36: #{block3d_forward.1} parent=31 // pred_fallthru
        _
    $region32: #{block3d_forward.1} parent=5 // pred_fallthru
      _
    %p207 = scmp.le.s32.totalorder 1, %s11
    %p208 = scmp.lt.s32.totalorder %s11, 9
    %p209 = pnand %p207, %p208
    %p210 = pneg %p209
    // Predicated region
    $region37: #{block3d_forward.1} parent=5 // pred_check
      _
    $region38: #{block3d_forward.1} parent=5 // pred_check_branch
      %212 = sbr.rel (%p209) target = $region40
    $region39: #{block3d_forward.1} parent=5 // pred_region
      %s213 = ssub.s32 %s11, 1
      %s214 = smul.u32 4, %s21
      %p215 = scmp.lt.s32.totalorder %s20, 1
      %s216 = scalar_select %p215, %s20, 1
      %p217 = scmp.lt.s32.totalorder %s214, 15
      %s218 = scalar_select %p217, %s214, 15
      %s219 = smul.addr %s216, 16
      %s220 = sadd.s32 %s218, %s219
      %s221 = smul.addr %s220, 4
      %s222 = scalar_lea.vmem %s0, %s221
      %p223 = pneg %p51
      %p224 = pneg %p48
      %p225 = pneg %p72
      %p226 = pneg %p69
      %p227 = pneg %p93
      %p228 = pneg %p90
      %p229 = pneg %p114
      %p230 = pneg %p111
      %p231 = pneg %p135
      %p232 = pneg %p132
      %p233 = pneg %p163
      %p234 = pneg %p160
      %s235 = smul.u32 4, %s21
      %p236 = scmp.lt.s32.totalorder %s20, 1
      %s237 = scalar_select %p236, %s20, 1
      %p238 = scmp.lt.s32.totalorder %s235, 15
      %s239 = scalar_select %p238, %s235, 15
      %s240 = smul.addr %s237, 16
      %s241 = sadd.s32 %s239, %s240
      %s242 = smul.addr %s241, 8
      %s243 = scalar_lea.vmem %s5, %s242
      %s244 = smul.u32 4, %s21
      %p245 = scmp.lt.s32.totalorder %s20, 1
      %s246 = scalar_select %p245, %s20, 1
      %p247 = scmp.lt.s32.totalorder %s244, 15
      %s248 = scalar_select %p247, %s244, 15
      %s249 = smul.addr %s246, 16
      %s250 = sadd.s32 %s248, %s249
      %s251 = smul.addr %s250, 4
      %s252 = scalar_lea.vmem %s0, %s251
      %s253 = smul.u32 4, %s21
      %s254 = smul.u32 4, %s21
      %p255 = scmp.lt.s32.totalorder %s20, 1
      %s256 = scalar_select %p255, %s20, 1
      %p257 = scmp.lt.s32.totalorder %s254, 15
      %s258 = scalar_select %p257, %s254, 15
      %s259 = smul.addr %s256, 16
      %s260 = sadd.s32 %s258, %s259
      %s261 = smul.addr %s260, 8
      %s262 = scalar_lea.vmem %s5, %s261
      %s263 = smul.u32 4, %s21
      %v264 = vld [vmem:[%s252] sm:$0xff]
      %v265 = vld [vmem:[%s252 + $0x8] sm:$0xff]
      %v266 = vld [vmem:[%s2] sm:$0xff]
      %v267 = vld [vmem:[%s3] sm:$0xff]
      %vm268 = vcmp.gt.f32.partialorder %v266, 0.0
      %vm269 = vcmp.gt.f32.partialorder %v267, 0.0
      %v272 = vcombine.high %v264, %v264
      %v273 = vcombine.high %v265, %v265
      %276 = vrot.lane.b32.xlu0 %v264, 1
      %v277 = vpop.permute.xlu0 %276
      %278 = vrot.lane.b32.xlu0 %v272, 1
      %v279 = vpop.permute.xlu0 %278
      %280 = vrot.lane.b32.xlu0 %v265, 1
      %v281 = vpop.permute.xlu0 %280
      %282 = vrot.lane.b32.xlu0 %v273, 1
      %v283 = vpop.permute.xlu0 %282
      %v284 = vlaneseq
      %v285 = vand.u32 %v284, 127
      %vm286 = vcmp.lt.s32.totalorder %v285, 1
      %v287 = vsel %vm286, %v281, %v283
      %v288 = vsel %vm286, %v279, %v281
      %v289 = vsel %vm286, %v277, %v279
      %v290 = vsel %vm286, %v283, %v277
      %v291 = vsel %vm268, 1, 0
      %v292 = vlaneseq
      %v293 = vshrl.u32 %v292, 7
      %v294 = vsub.s32 0, %v293
      %v295 = vrot.slane %v291, %v294
      %v296 = vlaneseq
      %v297 = vshrl.u32 %v296, 7
      %v298 = vsub.s32 2, %v297
      %v299 = vrot.slane %v291, %v298
      %v300 = vlaneseq
      %v301 = vshrl.u32 %v300, 7
      %v302 = vsub.s32 4, %v301
      %v303 = vrot.slane %v291, %v302
      %v304 = vlaneseq
      %v305 = vshrl.u32 %v304, 7
      %v306 = vsub.s32 6, %v305
      %v307 = vrot.slane %v291, %v306
      %v308 = vlaneseq
      %v309 = vshrl.u32 %v308, 7
      %v310 = vsub.s32 0, %v309
      %v311 = vrot.slane %v295, %v310
      %v312 = vlaneseq
      %v313 = vshrl.u32 %v312, 7
      %v314 = vsub.s32 0, %v313
      %v315 = vrot.slane %v299, %v314
      %v316 = vlaneseq
      %v317 = vshrl.u32 %v316, 7
      %v318 = vsub.s32 0, %v317
      %v319 = vrot.slane %v303, %v318
      %v320 = vlaneseq
      %v321 = vshrl.u32 %v320, 7
      %v322 = vsub.s32 0, %v321
      %v323 = vrot.slane %v307, %v322
      %vm324 = vcmp.eq.s32.totalorder %v311, 1
      %vm325 = vcmp.eq.s32.totalorder %v315, 1
      %vm326 = vcmp.eq.s32.totalorder %v319, 1
      %vm327 = vcmp.eq.s32.totalorder %v323, 1
      %v328 = vsel %vm324, %v290, 0.0
      %v329 = vsel %vm325, %v289, 0.0
      %v330 = vsel %vm326, %v288, 0.0
      %v331 = vsel %vm327, %v287, 0.0
      %332 = vrot.lane.b32.xlu0 %v264, 127
      %v333 = vpop.permute.xlu0 %332
      %334 = vrot.lane.b32.xlu0 %v272, 127
      %v335 = vpop.permute.xlu0 %334
      %336 = vrot.lane.b32.xlu0 %v265, 127
      %v337 = vpop.permute.xlu0 %336
      %338 = vrot.lane.b32.xlu0 %v273, 127
      %v339 = vpop.permute.xlu0 %338
      %vm340 = vcmp.lt.s32.totalorder %v285, 127
      %v341 = vsel %vm340, %v337, %v339
      %v342 = vsel %vm340, %v335, %v337
      %v343 = vsel %vm340, %v333, %v335
      %v344 = vsel %vm340, %v339, %v333
      %v345 = vlaneseq
      %v346 = vshrl.u32 %v345, 7
      %v347 = vsub.s32 1, %v346
      %v348 = vrot.slane %v291, %v347
      %v349 = vlaneseq
      %v350 = vshrl.u32 %v349, 7
      %v351 = vsub.s32 3, %v350
      %v352 = vrot.slane %v291, %v351
      %v353 = vlaneseq
      %v354 = vshrl.u32 %v353, 7
      %v355 = vsub.s32 5, %v354
      %v356 = vrot.slane %v291, %v355
      %v357 = vlaneseq
      %v358 = vshrl.u32 %v357, 7
      %v359 = vsub.s32 7, %v358
      %v360 = vrot.slane %v291, %v359
      %v361 = vlaneseq
      %v362 = vshrl.u32 %v361, 7
      %v363 = vsub.s32 1, %v362
      %v364 = vrot.slane %v348, %v363
      %v365 = vlaneseq
      %v366 = vshrl.u32 %v365, 7
      %v367 = vsub.s32 1, %v366
      %v368 = vrot.slane %v352, %v367
      %v369 = vlaneseq
      %v370 = vshrl.u32 %v369, 7
      %v371 = vsub.s32 1, %v370
      %v372 = vrot.slane %v356, %v371
      %v373 = vlaneseq
      %v374 = vshrl.u32 %v373, 7
      %v375 = vsub.s32 1, %v374
      %v376 = vrot.slane %v360, %v375
      %vm377 = vcmp.eq.s32.totalorder %v364, 1
      %vm378 = vcmp.eq.s32.totalorder %v368, 1
      %vm379 = vcmp.eq.s32.totalorder %v372, 1
      %vm380 = vcmp.eq.s32.totalorder %v376, 1
      %v381 = vsel %vm377, %v343, 0.0
      %v382 = vsel %vm378, %v342, 0.0
      %v383 = vsel %vm379, %v341, 0.0
      %v384 = vsel %vm380, %v344, 0.0
      %v385 = vld [vmem:[%s1] sm:$0xff]
      %s386 = scalar_lea.vmem %s1, 8
      %v387 = vld [vmem:[%s386] sm:$0xff]
      %vm388 = vcmask 31744
      %v390 = vsel %vm388, %v387, 0
      %vm392 = vcmask 1043456
      %v393 = vsel %vm392, %v264, 0
      %v395 = vsel %vm392, %v272, 0
      %v397 = vsel %vm392, %v265, 0
      %v399 = vsel %vm392, %v273, 0
      %401 = vmatprep.subr.mxu0 0.0
      %402 = vmatpush1.msra.mxu0 0.0
      %403 = vmatprep.subr.mxu0 0.0
      %404 = vmatpush1.msra.mxu0 0.0
      %405 = vmatprep.subr.mxu0 0.0
      %406 = vmatpush1.msra.mxu0 0.0
      %407 = vmatprep.subr.mxu0 0.0
      %408 = vmatpush1.msra.mxu0 0.0
      %409 = vmatprep.subr.mxu0 0.0
      %410 = vmatpush1.msra.mxu0 0.0
      %411 = vmatprep.subr.mxu0 0.0
      %412 = vmatpush1.msra.mxu0 0.0
      %413 = vmatprep.subr.mxu0 0.0
      %414 = vmatpush1.msra.mxu0 0.0
      %415 = vmatprep.subr.mxu0 0.0
      %416 = vmatpush1.msra.mxu0 0.0
      %417 = vmatprep.subr.mxu0 0.0
      %418 = vmatpush1.msra.mxu0 0.0
      %419 = vmatprep.subr.mxu0 0.0
      %420 = vmatpush1.msra.mxu0 0.0
      %421 = vmatprep.subr.mxu0 0.0
      %422 = vmatpush1.msra.mxu0 0.0
      %423 = vmatprep.subr.mxu0 0.0
      %424 = vmatpush1.msra.mxu0 0.0
      %425 = vmatprep.subr.mxu0 0.0
      %426 = vmatpush1.msra.mxu0 0.0
      %427 = vmatprep.subr.mxu0 0.0
      %428 = vmatpush1.msra.mxu0 0.0
      %429 = vmatprep.subr.mxu0 0.0
      %430 = vmatpush1.msra.mxu0 0.0
      %431 = vmatprep.subr.mxu0 %v395
      %432 = vmatpush1.msra.mxu0 %v393
      %433 = vmatprep.subr.mxu0 0.0
      %434 = vmatpush2.msra.mxu0 0.0
      %435 = vmatprep.subr.mxu0 0.0
      %436 = vmatpush2.msra.mxu0 0.0
      %437 = vmatprep.subr.mxu0 0.0
      %438 = vmatpush2.msra.mxu0 0.0
      %439 = vmatprep.subr.mxu0 0.0
      %440 = vmatpush2.msra.mxu0 0.0
      %441 = vmatprep.subr.mxu0 0.0
      %442 = vmatpush2.msra.mxu0 0.0
      %443 = vmatprep.subr.mxu0 0.0
      %444 = vmatpush2.msra.mxu0 0.0
      %445 = vmatprep.subr.mxu0 0.0
      %446 = vmatpush2.msra.mxu0 0.0
      %447 = vmatprep.subr.mxu0 0.0
      %448 = vmatpush2.msra.mxu0 0.0
      %449 = vmatprep.subr.mxu0 0.0
      %450 = vmatpush2.msra.mxu0 0.0
      %451 = vmatprep.subr.mxu0 0.0
      %452 = vmatpush2.msra.mxu0 0.0
      %453 = vmatprep.subr.mxu0 0.0
      %454 = vmatpush2.msra.mxu0 0.0
      %455 = vmatprep.subr.mxu0 0.0
      %456 = vmatpush2.msra.mxu0 0.0
      %457 = vmatprep.subr.mxu0 0.0
      %458 = vmatpush2.msra.mxu0 0.0
      %459 = vmatprep.subr.mxu0 0.0
      %460 = vmatpush2.msra.mxu0 0.0
      %461 = vmatprep.subr.mxu0 0.0
      %462 = vmatpush2.msra.mxu0 0.0
      %463 = vmatprep.subr.mxu0 0.0
      %464 = vmatpush2.msra.mxu0 0.0
      %465 = vmatprep.mubr.f32.mxu0 0.0
      %466 = vmatmul.mubr.f32.gmra.mxu0 %v390
      %v467 = vpop.f32.mrf.mxu0
      %v468 = vadd.f32 0.0, %v467
      %v469 = vpop.f32.mrf.mxu0
      %v470 = vadd.f32 0.0, %v469
      %471 = vdwg.mxu0
      %472 = vmatprep.subr.mxu0 0.0
      %473 = vmatpush1.msra.mxu0 0.0
      %474 = vmatprep.subr.mxu0 0.0
      %475 = vmatpush1.msra.mxu0 0.0
      %476 = vmatprep.subr.mxu0 0.0
      %477 = vmatpush1.msra.mxu0 0.0
      %478 = vmatprep.subr.mxu0 0.0
      %479 = vmatpush1.msra.mxu0 0.0
      %480 = vmatprep.subr.mxu0 0.0
      %481 = vmatpush1.msra.mxu0 0.0
      %482 = vmatprep.subr.mxu0 0.0
      %483 = vmatpush1.msra.mxu0 0.0
      %484 = vmatprep.subr.mxu0 0.0
      %485 = vmatpush1.msra.mxu0 0.0
      %486 = vmatprep.subr.mxu0 0.0
      %487 = vmatpush1.msra.mxu0 0.0
      %488 = vmatprep.subr.mxu0 0.0
      %489 = vmatpush1.msra.mxu0 0.0
      %490 = vmatprep.subr.mxu0 0.0
      %491 = vmatpush1.msra.mxu0 0.0
      %492 = vmatprep.subr.mxu0 0.0
      %493 = vmatpush1.msra.mxu0 0.0
      %494 = vmatprep.subr.mxu0 0.0
      %495 = vmatpush1.msra.mxu0 0.0
      %496 = vmatprep.subr.mxu0 0.0
      %497 = vmatpush1.msra.mxu0 0.0
      %498 = vmatprep.subr.mxu0 0.0
      %499 = vmatpush1.msra.mxu0 0.0
      %500 = vmatprep.subr.mxu0 0.0
      %501 = vmatpush1.msra.mxu0 0.0
      %502 = vmatprep.subr.mxu0 %v399
      %503 = vmatpush1.msra.mxu0 %v397
      %504 = vmatprep.subr.mxu0 0.0
      %505 = vmatpush2.msra.mxu0 0.0
      %506 = vmatprep.subr.mxu0 0.0
      %507 = vmatpush2.msra.mxu0 0.0
      %508 = vmatprep.subr.mxu0 0.0
      %509 = vmatpush2.msra.mxu0 0.0
      %510 = vmatprep.subr.mxu0 0.0
      %511 = vmatpush2.msra.mxu0 0.0
      %512 = vmatprep.subr.mxu0 0.0
      %513 = vmatpush2.msra.mxu0 0.0
      %514 = vmatprep.subr.mxu0 0.0
      %515 = vmatpush2.msra.mxu0 0.0
      %516 = vmatprep.subr.mxu0 0.0
      %517 = vmatpush2.msra.mxu0 0.0
      %518 = vmatprep.subr.mxu0 0.0
      %519 = vmatpush2.msra.mxu0 0.0
      %520 = vmatprep.subr.mxu0 0.0
      %521 = vmatpush2.msra.mxu0 0.0
      %522 = vmatprep.subr.mxu0 0.0
      %523 = vmatpush2.msra.mxu0 0.0
      %524 = vmatprep.subr.mxu0 0.0
      %525 = vmatpush2.msra.mxu0 0.0
      %526 = vmatprep.subr.mxu0 0.0
      %527 = vmatpush2.msra.mxu0 0.0
      %528 = vmatprep.subr.mxu0 0.0
      %529 = vmatpush2.msra.mxu0 0.0
      %530 = vmatprep.subr.mxu0 0.0
      %531 = vmatpush2.msra.mxu0 0.0
      %532 = vmatprep.subr.mxu0 0.0
      %533 = vmatpush2.msra.mxu0 0.0
      %534 = vmatprep.subr.mxu0 0.0
      %535 = vmatpush2.msra.mxu0 0.0
      %536 = vmatprep.mubr.f32.mxu0 0.0
      %537 = vmatmul.mubr.f32.gmra.mxu0 %v390
      %v538 = vpop.f32.mrf.mxu0
      %v539 = vadd.f32 0.0, %v538
      %v540 = vpop.f32.mrf.mxu0
      %v541 = vadd.f32 0.0, %v540
      %542 = vdwg.mxu0
      %v544 = vsel %vm388, %v385, 0
      %v547 = vsel %vm392, %v328, 0
      %v550 = vsel %vm392, %v329, 0
      %v553 = vsel %vm392, %v330, 0
      %v556 = vsel %vm392, %v331, 0
      %558 = vmatprep.subr.mxu0 0.0
      %559 = vmatpush1.msra.mxu0 0.0
      %560 = vmatprep.subr.mxu0 0.0
      %561 = vmatpush1.msra.mxu0 0.0
      %562 = vmatprep.subr.mxu0 0.0
      %563 = vmatpush1.msra.mxu0 0.0
      %564 = vmatprep.subr.mxu0 0.0
      %565 = vmatpush1.msra.mxu0 0.0
      %566 = vmatprep.subr.mxu0 0.0
      %567 = vmatpush1.msra.mxu0 0.0
      %568 = vmatprep.subr.mxu0 0.0
      %569 = vmatpush1.msra.mxu0 0.0
      %570 = vmatprep.subr.mxu0 0.0
      %571 = vmatpush1.msra.mxu0 0.0
      %572 = vmatprep.subr.mxu0 0.0
      %573 = vmatpush1.msra.mxu0 0.0
      %574 = vmatprep.subr.mxu0 0.0
      %575 = vmatpush1.msra.mxu0 0.0
      %576 = vmatprep.subr.mxu0 0.0
      %577 = vmatpush1.msra.mxu0 0.0
      %578 = vmatprep.subr.mxu0 0.0
      %579 = vmatpush1.msra.mxu0 0.0
      %580 = vmatprep.subr.mxu0 0.0
      %581 = vmatpush1.msra.mxu0 0.0
      %582 = vmatprep.subr.mxu0 0.0
      %583 = vmatpush1.msra.mxu0 0.0
      %584 = vmatprep.subr.mxu0 0.0
      %585 = vmatpush1.msra.mxu0 0.0
      %586 = vmatprep.subr.mxu0 0.0
      %587 = vmatpush1.msra.mxu0 0.0
      %588 = vmatprep.subr.mxu0 %v550
      %589 = vmatpush1.msra.mxu0 %v547
      %590 = vmatprep.subr.mxu0 0.0
      %591 = vmatpush2.msra.mxu0 0.0
      %592 = vmatprep.subr.mxu0 0.0
      %593 = vmatpush2.msra.mxu0 0.0
      %594 = vmatprep.subr.mxu0 0.0
      %595 = vmatpush2.msra.mxu0 0.0
      %596 = vmatprep.subr.mxu0 0.0
      %597 = vmatpush2.msra.mxu0 0.0
      %598 = vmatprep.subr.mxu0 0.0
      %599 = vmatpush2.msra.mxu0 0.0
      %600 = vmatprep.subr.mxu0 0.0
      %601 = vmatpush2.msra.mxu0 0.0
      %602 = vmatprep.subr.mxu0 0.0
      %603 = vmatpush2.msra.mxu0 0.0
      %604 = vmatprep.subr.mxu0 0.0
      %605 = vmatpush2.msra.mxu0 0.0
      %606 = vmatprep.subr.mxu0 0.0
      %607 = vmatpush2.msra.mxu0 0.0
      %608 = vmatprep.subr.mxu0 0.0
      %609 = vmatpush2.msra.mxu0 0.0
      %610 = vmatprep.subr.mxu0 0.0
      %611 = vmatpush2.msra.mxu0 0.0
      %612 = vmatprep.subr.mxu0 0.0
      %613 = vmatpush2.msra.mxu0 0.0
      %614 = vmatprep.subr.mxu0 0.0
      %615 = vmatpush2.msra.mxu0 0.0
      %616 = vmatprep.subr.mxu0 0.0
      %617 = vmatpush2.msra.mxu0 0.0
      %618 = vmatprep.subr.mxu0 0.0
      %619 = vmatpush2.msra.mxu0 0.0
      %620 = vmatprep.subr.mxu0 0.0
      %621 = vmatpush2.msra.mxu0 0.0
      %622 = vmatprep.mubr.f32.mxu0 0.0
      %623 = vmatmul.mubr.f32.gmra.mxu0 %v544
      %v624 = vpop.f32.mrf.mxu0
      %v625 = vadd.f32 %v468, %v624
      %v626 = vpop.f32.mrf.mxu0
      %v627 = vadd.f32 %v470, %v626
      %628 = vdwg.mxu0
      %629 = vmatprep.subr.mxu0 0.0
      %630 = vmatpush1.msra.mxu0 0.0
      %631 = vmatprep.subr.mxu0 0.0
      %632 = vmatpush1.msra.mxu0 0.0
      %633 = vmatprep.subr.mxu0 0.0
      %634 = vmatpush1.msra.mxu0 0.0
      %635 = vmatprep.subr.mxu0 0.0
      %636 = vmatpush1.msra.mxu0 0.0
      %637 = vmatprep.subr.mxu0 0.0
      %638 = vmatpush1.msra.mxu0 0.0
      %639 = vmatprep.subr.mxu0 0.0
      %640 = vmatpush1.msra.mxu0 0.0
      %641 = vmatprep.subr.mxu0 0.0
      %642 = vmatpush1.msra.mxu0 0.0
      %643 = vmatprep.subr.mxu0 0.0
      %644 = vmatpush1.msra.mxu0 0.0
      %645 = vmatprep.subr.mxu0 0.0
      %646 = vmatpush1.msra.mxu0 0.0
      %647 = vmatprep.subr.mxu0 0.0
      %648 = vmatpush1.msra.mxu0 0.0
      %649 = vmatprep.subr.mxu0 0.0
      %650 = vmatpush1.msra.mxu0 0.0
      %651 = vmatprep.subr.mxu0 0.0
      %652 = vmatpush1.msra.mxu0 0.0
      %653 = vmatprep.subr.mxu0 0.0
      %654 = vmatpush1.msra.mxu0 0.0
      %655 = vmatprep.subr.mxu0 0.0
      %656 = vmatpush1.msra.mxu0 0.0
      %657 = vmatprep.subr.mxu0 0.0
      %658 = vmatpush1.msra.mxu0 0.0
      %659 = vmatprep.subr.mxu0 %v556
      %660 = vmatpush1.msra.mxu0 %v553
      %661 = vmatprep.subr.mxu0 0.0
      %662 = vmatpush2.msra.mxu0 0.0
      %663 = vmatprep.subr.mxu0 0.0
      %664 = vmatpush2.msra.mxu0 0.0
      %665 = vmatprep.subr.mxu0 0.0
      %666 = vmatpush2.msra.mxu0 0.0
      %667 = vmatprep.subr.mxu0 0.0
      %668 = vmatpush2.msra.mxu0 0.0
      %669 = vmatprep.subr.mxu0 0.0
      %670 = vmatpush2.msra.mxu0 0.0
      %671 = vmatprep.subr.mxu0 0.0
      %672 = vmatpush2.msra.mxu0 0.0
      %673 = vmatprep.subr.mxu0 0.0
      %674 = vmatpush2.msra.mxu0 0.0
      %675 = vmatprep.subr.mxu0 0.0
      %676 = vmatpush2.msra.mxu0 0.0
      %677 = vmatprep.subr.mxu0 0.0
      %678 = vmatpush2.msra.mxu0 0.0
      %679 = vmatprep.subr.mxu0 0.0
      %680 = vmatpush2.msra.mxu0 0.0
      %681 = vmatprep.subr.mxu0 0.0
      %682 = vmatpush2.msra.mxu0 0.0
      %683 = vmatprep.subr.mxu0 0.0
      %684 = vmatpush2.msra.mxu0 0.0
      %685 = vmatprep.subr.mxu0 0.0
      %686 = vmatpush2.msra.mxu0 0.0
      %687 = vmatprep.subr.mxu0 0.0
      %688 = vmatpush2.msra.mxu0 0.0
      %689 = vmatprep.subr.mxu0 0.0
      %690 = vmatpush2.msra.mxu0 0.0
      %691 = vmatprep.subr.mxu0 0.0
      %692 = vmatpush2.msra.mxu0 0.0
      %693 = vmatprep.mubr.f32.mxu0 0.0
      %694 = vmatmul.mubr.f32.gmra.mxu0 %v544
      %v695 = vpop.f32.mrf.mxu0
      %v696 = vadd.f32 %v539, %v695
      %v697 = vpop.f32.mrf.mxu0
      %v698 = vadd.f32 %v541, %v697
      %699 = vdwg.mxu0
      %s700 = scalar_lea.vmem %s1, 16
      %v701 = vld [vmem:[%s700] sm:$0xff]
      %v703 = vsel %vm388, %v701, 0
      %v706 = vsel %vm392, %v381, 0
      %v709 = vsel %vm392, %v382, 0
      %v712 = vsel %vm392, %v383, 0
      %v715 = vsel %vm392, %v384, 0
      %717 = vmatprep.subr.mxu0 0.0
      %718 = vmatpush1.msra.mxu0 0.0
      %719 = vmatprep.subr.mxu0 0.0
      %720 = vmatpush1.msra.mxu0 0.0
      %721 = vmatprep.subr.mxu0 0.0
      %722 = vmatpush1.msra.mxu0 0.0
      %723 = vmatprep.subr.mxu0 0.0
      %724 = vmatpush1.msra.mxu0 0.0
      %725 = vmatprep.subr.mxu0 0.0
      %726 = vmatpush1.msra.mxu0 0.0
      %727 = vmatprep.subr.mxu0 0.0
      %728 = vmatpush1.msra.mxu0 0.0
      %729 = vmatprep.subr.mxu0 0.0
      %730 = vmatpush1.msra.mxu0 0.0
      %731 = vmatprep.subr.mxu0 0.0
      %732 = vmatpush1.msra.mxu0 0.0
      %733 = vmatprep.subr.mxu0 0.0
      %734 = vmatpush1.msra.mxu0 0.0
      %735 = vmatprep.subr.mxu0 0.0
      %736 = vmatpush1.msra.mxu0 0.0
      %737 = vmatprep.subr.mxu0 0.0
      %738 = vmatpush1.msra.mxu0 0.0
      %739 = vmatprep.subr.mxu0 0.0
      %740 = vmatpush1.msra.mxu0 0.0
      %741 = vmatprep.subr.mxu0 0.0
      %742 = vmatpush1.msra.mxu0 0.0
      %743 = vmatprep.subr.mxu0 0.0
      %744 = vmatpush1.msra.mxu0 0.0
      %745 = vmatprep.subr.mxu0 0.0
      %746 = vmatpush1.msra.mxu0 0.0
      %747 = vmatprep.subr.mxu0 %v709
      %748 = vmatpush1.msra.mxu0 %v706
      %749 = vmatprep.subr.mxu0 0.0
      %750 = vmatpush2.msra.mxu0 0.0
      %751 = vmatprep.subr.mxu0 0.0
      %752 = vmatpush2.msra.mxu0 0.0
      %753 = vmatprep.subr.mxu0 0.0
      %754 = vmatpush2.msra.mxu0 0.0
      %755 = vmatprep.subr.mxu0 0.0
      %756 = vmatpush2.msra.mxu0 0.0
      %757 = vmatprep.subr.mxu0 0.0
      %758 = vmatpush2.msra.mxu0 0.0
      %759 = vmatprep.subr.mxu0 0.0
      %760 = vmatpush2.msra.mxu0 0.0
      %761 = vmatprep.subr.mxu0 0.0
      %762 = vmatpush2.msra.mxu0 0.0
      %763 = vmatprep.subr.mxu0 0.0
      %764 = vmatpush2.msra.mxu0 0.0
      %765 = vmatprep.subr.mxu0 0.0
      %766 = vmatpush2.msra.mxu0 0.0
      %767 = vmatprep.subr.mxu0 0.0
      %768 = vmatpush2.msra.mxu0 0.0
      %769 = vmatprep.subr.mxu0 0.0
      %770 = vmatpush2.msra.mxu0 0.0
      %771 = vmatprep.subr.mxu0 0.0
      %772 = vmatpush2.msra.mxu0 0.0
      %773 = vmatprep.subr.mxu0 0.0
      %774 = vmatpush2.msra.mxu0 0.0
      %775 = vmatprep.subr.mxu0 0.0
      %776 = vmatpush2.msra.mxu0 0.0
      %777 = vmatprep.subr.mxu0 0.0
      %778 = vmatpush2.msra.mxu0 0.0
      %779 = vmatprep.subr.mxu0 0.0
      %780 = vmatpush2.msra.mxu0 0.0
      %781 = vmatprep.mubr.f32.mxu0 0.0
      %782 = vmatmul.mubr.f32.gmra.mxu0 %v703
      %v783 = vpop.f32.mrf.mxu0
      %v784 = vadd.f32 0.0, %v783
      %v785 = vpop.f32.mrf.mxu0
      %v786 = vadd.f32 0.0, %v785
      %787 = vdwg.mxu0
      %788 = vmatprep.subr.mxu0 0.0
      %789 = vmatpush1.msra.mxu0 0.0
      %790 = vmatprep.subr.mxu0 0.0
      %791 = vmatpush1.msra.mxu0 0.0
      %792 = vmatprep.subr.mxu0 0.0
      %793 = vmatpush1.msra.mxu0 0.0
      %794 = vmatprep.subr.mxu0 0.0
      %795 = vmatpush1.msra.mxu0 0.0
      %796 = vmatprep.subr.mxu0 0.0
      %797 = vmatpush1.msra.mxu0 0.0
      %798 = vmatprep.subr.mxu0 0.0
      %799 = vmatpush1.msra.mxu0 0.0
      %800 = vmatprep.subr.mxu0 0.0
      %801 = vmatpush1.msra.mxu0 0.0
      %802 = vmatprep.subr.mxu0 0.0
      %803 = vmatpush1.msra.mxu0 0.0
      %804 = vmatprep.subr.mxu0 0.0
      %805 = vmatpush1.msra.mxu0 0.0
      %806 = vmatprep.subr.mxu0 0.0
      %807 = vmatpush1.msra.mxu0 0.0
      %808 = vmatprep.subr.mxu0 0.0
      %809 = vmatpush1.msra.mxu0 0.0
      %810 = vmatprep.subr.mxu0 0.0
      %811 = vmatpush1.msra.mxu0 0.0
      %812 = vmatprep.subr.mxu0 0.0
      %813 = vmatpush1.msra.mxu0 0.0
      %814 = vmatprep.subr.mxu0 0.0
      %815 = vmatpush1.msra.mxu0 0.0
      %816 = vmatprep.subr.mxu0 0.0
      %817 = vmatpush1.msra.mxu0 0.0
      %818 = vmatprep.subr.mxu0 %v715
      %819 = vmatpush1.msra.mxu0 %v712
      %820 = vmatprep.subr.mxu0 0.0
      %821 = vmatpush2.msra.mxu0 0.0
      %822 = vmatprep.subr.mxu0 0.0
      %823 = vmatpush2.msra.mxu0 0.0
      %824 = vmatprep.subr.mxu0 0.0
      %825 = vmatpush2.msra.mxu0 0.0
      %826 = vmatprep.subr.mxu0 0.0
      %827 = vmatpush2.msra.mxu0 0.0
      %828 = vmatprep.subr.mxu0 0.0
      %829 = vmatpush2.msra.mxu0 0.0
      %830 = vmatprep.subr.mxu0 0.0
      %831 = vmatpush2.msra.mxu0 0.0
      %832 = vmatprep.subr.mxu0 0.0
      %833 = vmatpush2.msra.mxu0 0.0
      %834 = vmatprep.subr.mxu0 0.0
      %835 = vmatpush2.msra.mxu0 0.0
      %836 = vmatprep.subr.mxu0 0.0
      %837 = vmatpush2.msra.mxu0 0.0
      %838 = vmatprep.subr.mxu0 0.0
      %839 = vmatpush2.msra.mxu0 0.0
      %840 = vmatprep.subr.mxu0 0.0
      %841 = vmatpush2.msra.mxu0 0.0
      %842 = vmatprep.subr.mxu0 0.0
      %843 = vmatpush2.msra.mxu0 0.0
      %844 = vmatprep.subr.mxu0 0.0
      %845 = vmatpush2.msra.mxu0 0.0
      %846 = vmatprep.subr.mxu0 0.0
      %847 = vmatpush2.msra.mxu0 0.0
      %848 = vmatprep.subr.mxu0 0.0
      %849 = vmatpush2.msra.mxu0 0.0
      %850 = vmatprep.subr.mxu0 0.0
      %851 = vmatpush2.msra.mxu0 0.0
      %852 = vmatprep.mubr.f32.mxu0 0.0
      %853 = vmatmul.mubr.f32.gmra.mxu0 %v703
      %v854 = vpop.f32.mrf.mxu0
      %v855 = vadd.f32 0.0, %v854
      %v856 = vpop.f32.mrf.mxu0
      %v857 = vadd.f32 0.0, %v856
      %858 = vdwg.mxu0
      %v859 = vadd.f32 %v625, %v784
      %v860 = vadd.f32 %v627, %v786
      %v861 = vadd.f32 %v696, %v855
      %v862 = vadd.f32 %v698, %v857
      %s863 = scalar_lea.vmem %s1, 24
      %v864 = vld [vmem:[%s863] sm:$0xff]
      %s865 = scalar_lea.vmem %s1, 32
      %v866 = vld [vmem:[%s865] sm:$0xff]
      %v868 = vsel %vm388, %v866, 0
      %870 = vmatprep.subr.mxu0 0.0
      %871 = vmatpush1.msra.mxu0 0.0
      %872 = vmatprep.subr.mxu0 0.0
      %873 = vmatpush1.msra.mxu0 0.0
      %874 = vmatprep.subr.mxu0 0.0
      %875 = vmatpush1.msra.mxu0 0.0
      %876 = vmatprep.subr.mxu0 0.0
      %877 = vmatpush1.msra.mxu0 0.0
      %878 = vmatprep.subr.mxu0 0.0
      %879 = vmatpush1.msra.mxu0 0.0
      %880 = vmatprep.subr.mxu0 0.0
      %881 = vmatpush1.msra.mxu0 0.0
      %882 = vmatprep.subr.mxu0 0.0
      %883 = vmatpush1.msra.mxu0 0.0
      %884 = vmatprep.subr.mxu0 0.0
      %885 = vmatpush1.msra.mxu0 0.0
      %886 = vmatprep.subr.mxu0 0.0
      %887 = vmatpush1.msra.mxu0 0.0
      %888 = vmatprep.subr.mxu0 0.0
      %889 = vmatpush1.msra.mxu0 0.0
      %890 = vmatprep.subr.mxu0 0.0
      %891 = vmatpush1.msra.mxu0 0.0
      %892 = vmatprep.subr.mxu0 0.0
      %893 = vmatpush1.msra.mxu0 0.0
      %894 = vmatprep.subr.mxu0 0.0
      %895 = vmatpush1.msra.mxu0 0.0
      %896 = vmatprep.subr.mxu0 0.0
      %897 = vmatpush1.msra.mxu0 0.0
      %898 = vmatprep.subr.mxu0 0.0
      %899 = vmatpush1.msra.mxu0 0.0
      %900 = vmatprep.subr.mxu0 %v395
      %901 = vmatpush1.msra.mxu0 %v393
      %902 = vmatprep.subr.mxu0 0.0
      %903 = vmatpush2.msra.mxu0 0.0
      %904 = vmatprep.subr.mxu0 0.0
      %905 = vmatpush2.msra.mxu0 0.0
      %906 = vmatprep.subr.mxu0 0.0
      %907 = vmatpush2.msra.mxu0 0.0
      %908 = vmatprep.subr.mxu0 0.0
      %909 = vmatpush2.msra.mxu0 0.0
      %910 = vmatprep.subr.mxu0 0.0
      %911 = vmatpush2.msra.mxu0 0.0
      %912 = vmatprep.subr.mxu0 0.0
      %913 = vmatpush2.msra.mxu0 0.0
      %914 = vmatprep.subr.mxu0 0.0
      %915 = vmatpush2.msra.mxu0 0.0
      %916 = vmatprep.subr.mxu0 0.0
      %917 = vmatpush2.msra.mxu0 0.0
      %918 = vmatprep.subr.mxu0 0.0
      %919 = vmatpush2.msra.mxu0 0.0
      %920 = vmatprep.subr.mxu0 0.0
      %921 = vmatpush2.msra.mxu0 0.0
      %922 = vmatprep.subr.mxu0 0.0
      %923 = vmatpush2.msra.mxu0 0.0
      %924 = vmatprep.subr.mxu0 0.0
      %925 = vmatpush2.msra.mxu0 0.0
      %926 = vmatprep.subr.mxu0 0.0
      %927 = vmatpush2.msra.mxu0 0.0
      %928 = vmatprep.subr.mxu0 0.0
      %929 = vmatpush2.msra.mxu0 0.0
      %930 = vmatprep.subr.mxu0 0.0
      %931 = vmatpush2.msra.mxu0 0.0
      %932 = vmatprep.subr.mxu0 0.0
      %933 = vmatpush2.msra.mxu0 0.0
      %934 = vmatprep.mubr.f32.mxu0 0.0
      %935 = vmatmul.mubr.f32.gmra.mxu0 %v868
      %v936 = vpop.f32.mrf.mxu0
      %v937 = vadd.f32 0.0, %v936
      %v938 = vpop.f32.mrf.mxu0
      %v939 = vadd.f32 0.0, %v938
      %940 = vdwg.mxu0
      %941 = vmatprep.subr.mxu0 0.0
      %942 = vmatpush1.msra.mxu0 0.0
      %943 = vmatprep.subr.mxu0 0.0
      %944 = vmatpush1.msra.mxu0 0.0
      %945 = vmatprep.subr.mxu0 0.0
      %946 = vmatpush1.msra.mxu0 0.0
      %947 = vmatprep.subr.mxu0 0.0
      %948 = vmatpush1.msra.mxu0 0.0
      %949 = vmatprep.subr.mxu0 0.0
      %950 = vmatpush1.msra.mxu0 0.0
      %951 = vmatprep.subr.mxu0 0.0
      %952 = vmatpush1.msra.mxu0 0.0
      %953 = vmatprep.subr.mxu0 0.0
      %954 = vmatpush1.msra.mxu0 0.0
      %955 = vmatprep.subr.mxu0 0.0
      %956 = vmatpush1.msra.mxu0 0.0
      %957 = vmatprep.subr.mxu0 0.0
      %958 = vmatpush1.msra.mxu0 0.0
      %959 = vmatprep.subr.mxu0 0.0
      %960 = vmatpush1.msra.mxu0 0.0
      %961 = vmatprep.subr.mxu0 0.0
      %962 = vmatpush1.msra.mxu0 0.0
      %963 = vmatprep.subr.mxu0 0.0
      %964 = vmatpush1.msra.mxu0 0.0
      %965 = vmatprep.subr.mxu0 0.0
      %966 = vmatpush1.msra.mxu0 0.0
      %967 = vmatprep.subr.mxu0 0.0
      %968 = vmatpush1.msra.mxu0 0.0
      %969 = vmatprep.subr.mxu0 0.0
      %970 = vmatpush1.msra.mxu0 0.0
      %971 = vmatprep.subr.mxu0 %v399
      %972 = vmatpush1.msra.mxu0 %v397
      %973 = vmatprep.subr.mxu0 0.0
      %974 = vmatpush2.msra.mxu0 0.0
      %975 = vmatprep.subr.mxu0 0.0
      %976 = vmatpush2.msra.mxu0 0.0
      %977 = vmatprep.subr.mxu0 0.0
      %978 = vmatpush2.msra.mxu0 0.0
      %979 = vmatprep.subr.mxu0 0.0
      %980 = vmatpush2.msra.mxu0 0.0
      %981 = vmatprep.subr.mxu0 0.0
      %982 = vmatpush2.msra.mxu0 0.0
      %983 = vmatprep.subr.mxu0 0.0
      %984 = vmatpush2.msra.mxu0 0.0
      %985 = vmatprep.subr.mxu0 0.0
      %986 = vmatpush2.msra.mxu0 0.0
      %987 = vmatprep.subr.mxu0 0.0
      %988 = vmatpush2.msra.mxu0 0.0
      %989 = vmatprep.subr.mxu0 0.0
      %990 = vmatpush2.msra.mxu0 0.0
      %991 = vmatprep.subr.mxu0 0.0
      %992 = vmatpush2.msra.mxu0 0.0
      %993 = vmatprep.subr.mxu0 0.0
      %994 = vmatpush2.msra.mxu0 0.0
      %995 = vmatprep.subr.mxu0 0.0
      %996 = vmatpush2.msra.mxu0 0.0
      %997 = vmatprep.subr.mxu0 0.0
      %998 = vmatpush2.msra.mxu0 0.0
      %999 = vmatprep.subr.mxu0 0.0
      %1000 = vmatpush2.msra.mxu0 0.0
      %1001 = vmatprep.subr.mxu0 0.0
      %1002 = vmatpush2.msra.mxu0 0.0
      %1003 = vmatprep.subr.mxu0 0.0
      %1004 = vmatpush2.msra.mxu0 0.0
      %1005 = vmatprep.mubr.f32.mxu0 0.0
      %1006 = vmatmul.mubr.f32.gmra.mxu0 %v868
      %v1007 = vpop.f32.mrf.mxu0
      %v1008 = vadd.f32 0.0, %v1007
      %v1009 = vpop.f32.mrf.mxu0
      %v1010 = vadd.f32 0.0, %v1009
      %1011 = vdwg.mxu0
      %v1013 = vsel %vm388, %v864, 0
      %1015 = vmatprep.subr.mxu0 0.0
      %1016 = vmatpush1.msra.mxu0 0.0
      %1017 = vmatprep.subr.mxu0 0.0
      %1018 = vmatpush1.msra.mxu0 0.0
      %1019 = vmatprep.subr.mxu0 0.0
      %1020 = vmatpush1.msra.mxu0 0.0
      %1021 = vmatprep.subr.mxu0 0.0
      %1022 = vmatpush1.msra.mxu0 0.0
      %1023 = vmatprep.subr.mxu0 0.0
      %1024 = vmatpush1.msra.mxu0 0.0
      %1025 = vmatprep.subr.mxu0 0.0
      %1026 = vmatpush1.msra.mxu0 0.0
      %1027 = vmatprep.subr.mxu0 0.0
      %1028 = vmatpush1.msra.mxu0 0.0
      %1029 = vmatprep.subr.mxu0 0.0
      %1030 = vmatpush1.msra.mxu0 0.0
      %1031 = vmatprep.subr.mxu0 0.0
      %1032 = vmatpush1.msra.mxu0 0.0
      %1033 = vmatprep.subr.mxu0 0.0
      %1034 = vmatpush1.msra.mxu0 0.0
      %1035 = vmatprep.subr.mxu0 0.0
      %1036 = vmatpush1.msra.mxu0 0.0
      %1037 = vmatprep.subr.mxu0 0.0
      %1038 = vmatpush1.msra.mxu0 0.0
      %1039 = vmatprep.subr.mxu0 0.0
      %1040 = vmatpush1.msra.mxu0 0.0
      %1041 = vmatprep.subr.mxu0 0.0
      %1042 = vmatpush1.msra.mxu0 0.0
      %1043 = vmatprep.subr.mxu0 0.0
      %1044 = vmatpush1.msra.mxu0 0.0
      %1045 = vmatprep.subr.mxu0 %v550
      %1046 = vmatpush1.msra.mxu0 %v547
      %1047 = vmatprep.subr.mxu0 0.0
      %1048 = vmatpush2.msra.mxu0 0.0
      %1049 = vmatprep.subr.mxu0 0.0
      %1050 = vmatpush2.msra.mxu0 0.0
      %1051 = vmatprep.subr.mxu0 0.0
      %1052 = vmatpush2.msra.mxu0 0.0
      %1053 = vmatprep.subr.mxu0 0.0
      %1054 = vmatpush2.msra.mxu0 0.0
      %1055 = vmatprep.subr.mxu0 0.0
      %1056 = vmatpush2.msra.mxu0 0.0
      %1057 = vmatprep.subr.mxu0 0.0
      %1058 = vmatpush2.msra.mxu0 0.0
      %1059 = vmatprep.subr.mxu0 0.0
      %1060 = vmatpush2.msra.mxu0 0.0
      %1061 = vmatprep.subr.mxu0 0.0
      %1062 = vmatpush2.msra.mxu0 0.0
      %1063 = vmatprep.subr.mxu0 0.0
      %1064 = vmatpush2.msra.mxu0 0.0
      %1065 = vmatprep.subr.mxu0 0.0
      %1066 = vmatpush2.msra.mxu0 0.0
      %1067 = vmatprep.subr.mxu0 0.0
      %1068 = vmatpush2.msra.mxu0 0.0
      %1069 = vmatprep.subr.mxu0 0.0
      %1070 = vmatpush2.msra.mxu0 0.0
      %1071 = vmatprep.subr.mxu0 0.0
      %1072 = vmatpush2.msra.mxu0 0.0
      %1073 = vmatprep.subr.mxu0 0.0
      %1074 = vmatpush2.msra.mxu0 0.0
      %1075 = vmatprep.subr.mxu0 0.0
      %1076 = vmatpush2.msra.mxu0 0.0
      %1077 = vmatprep.subr.mxu0 0.0
      %1078 = vmatpush2.msra.mxu0 0.0
      %1079 = vmatprep.mubr.f32.mxu0 0.0
      %1080 = vmatmul.mubr.f32.gmra.mxu0 %v1013
      %v1081 = vpop.f32.mrf.mxu0
      %v1082 = vadd.f32 %v937, %v1081
      %v1083 = vpop.f32.mrf.mxu0
      %v1084 = vadd.f32 %v939, %v1083
      %1085 = vdwg.mxu0
      %1086 = vmatprep.subr.mxu0 0.0
      %1087 = vmatpush1.msra.mxu0 0.0
      %1088 = vmatprep.subr.mxu0 0.0
      %1089 = vmatpush1.msra.mxu0 0.0
      %1090 = vmatprep.subr.mxu0 0.0
      %1091 = vmatpush1.msra.mxu0 0.0
      %1092 = vmatprep.subr.mxu0 0.0
      %1093 = vmatpush1.msra.mxu0 0.0
      %1094 = vmatprep.subr.mxu0 0.0
      %1095 = vmatpush1.msra.mxu0 0.0
      %1096 = vmatprep.subr.mxu0 0.0
      %1097 = vmatpush1.msra.mxu0 0.0
      %1098 = vmatprep.subr.mxu0 0.0
      %1099 = vmatpush1.msra.mxu0 0.0
      %1100 = vmatprep.subr.mxu0 0.0
      %1101 = vmatpush1.msra.mxu0 0.0
      %1102 = vmatprep.subr.mxu0 0.0
      %1103 = vmatpush1.msra.mxu0 0.0
      %1104 = vmatprep.subr.mxu0 0.0
      %1105 = vmatpush1.msra.mxu0 0.0
      %1106 = vmatprep.subr.mxu0 0.0
      %1107 = vmatpush1.msra.mxu0 0.0
      %1108 = vmatprep.subr.mxu0 0.0
      %1109 = vmatpush1.msra.mxu0 0.0
      %1110 = vmatprep.subr.mxu0 0.0
      %1111 = vmatpush1.msra.mxu0 0.0
      %1112 = vmatprep.subr.mxu0 0.0
      %1113 = vmatpush1.msra.mxu0 0.0
      %1114 = vmatprep.subr.mxu0 0.0
      %1115 = vmatpush1.msra.mxu0 0.0
      %1116 = vmatprep.subr.mxu0 %v556
      %1117 = vmatpush1.msra.mxu0 %v553
      %1118 = vmatprep.subr.mxu0 0.0
      %1119 = vmatpush2.msra.mxu0 0.0
      %1120 = vmatprep.subr.mxu0 0.0
      %1121 = vmatpush2.msra.mxu0 0.0
      %1122 = vmatprep.subr.mxu0 0.0
      %1123 = vmatpush2.msra.mxu0 0.0
      %1124 = vmatprep.subr.mxu0 0.0
      %1125 = vmatpush2.msra.mxu0 0.0
      %1126 = vmatprep.subr.mxu0 0.0
      %1127 = vmatpush2.msra.mxu0 0.0
      %1128 = vmatprep.subr.mxu0 0.0
      %1129 = vmatpush2.msra.mxu0 0.0
      %1130 = vmatprep.subr.mxu0 0.0
      %1131 = vmatpush2.msra.mxu0 0.0
      %1132 = vmatprep.subr.mxu0 0.0
      %1133 = vmatpush2.msra.mxu0 0.0
      %1134 = vmatprep.subr.mxu0 0.0
      %1135 = vmatpush2.msra.mxu0 0.0
      %1136 = vmatprep.subr.mxu0 0.0
      %1137 = vmatpush2.msra.mxu0 0.0
      %1138 = vmatprep.subr.mxu0 0.0
      %1139 = vmatpush2.msra.mxu0 0.0
      %1140 = vmatprep.subr.mxu0 0.0
      %1141 = vmatpush2.msra.mxu0 0.0
      %1142 = vmatprep.subr.mxu0 0.0
      %1143 = vmatpush2.msra.mxu0 0.0
      %1144 = vmatprep.subr.mxu0 0.0
      %1145 = vmatpush2.msra.mxu0 0.0
      %1146 = vmatprep.subr.mxu0 0.0
      %1147 = vmatpush2.msra.mxu0 0.0
      %1148 = vmatprep.subr.mxu0 0.0
      %1149 = vmatpush2.msra.mxu0 0.0
      %1150 = vmatprep.mubr.f32.mxu0 0.0
      %1151 = vmatmul.mubr.f32.gmra.mxu0 %v1013
      %v1152 = vpop.f32.mrf.mxu0
      %v1153 = vadd.f32 %v1008, %v1152
      %v1154 = vpop.f32.mrf.mxu0
      %v1155 = vadd.f32 %v1010, %v1154
      %1156 = vdwg.mxu0
      %s1157 = scalar_lea.vmem %s1, 40
      %v1158 = vld [vmem:[%s1157] sm:$0xff]
      %v1160 = vsel %vm388, %v1158, 0
      %1162 = vmatprep.subr.mxu0 0.0
      %1163 = vmatpush1.msra.mxu0 0.0
      %1164 = vmatprep.subr.mxu0 0.0
      %1165 = vmatpush1.msra.mxu0 0.0
      %1166 = vmatprep.subr.mxu0 0.0
      %1167 = vmatpush1.msra.mxu0 0.0
      %1168 = vmatprep.subr.mxu0 0.0
      %1169 = vmatpush1.msra.mxu0 0.0
      %1170 = vmatprep.subr.mxu0 0.0
      %1171 = vmatpush1.msra.mxu0 0.0
      %1172 = vmatprep.subr.mxu0 0.0
      %1173 = vmatpush1.msra.mxu0 0.0
      %1174 = vmatprep.subr.mxu0 0.0
      %1175 = vmatpush1.msra.mxu0 0.0
      %1176 = vmatprep.subr.mxu0 0.0
      %1177 = vmatpush1.msra.mxu0 0.0
      %1178 = vmatprep.subr.mxu0 0.0
      %1179 = vmatpush1.msra.mxu0 0.0
      %1180 = vmatprep.subr.mxu0 0.0
      %1181 = vmatpush1.msra.mxu0 0.0
      %1182 = vmatprep.subr.mxu0 0.0
      %1183 = vmatpush1.msra.mxu0 0.0
      %1184 = vmatprep.subr.mxu0 0.0
      %1185 = vmatpush1.msra.mxu0 0.0
      %1186 = vmatprep.subr.mxu0 0.0
      %1187 = vmatpush1.msra.mxu0 0.0
      %1188 = vmatprep.subr.mxu0 0.0
      %1189 = vmatpush1.msra.mxu0 0.0
      %1190 = vmatprep.subr.mxu0 0.0
      %1191 = vmatpush1.msra.mxu0 0.0
      %1192 = vmatprep.subr.mxu0 %v709
      %1193 = vmatpush1.msra.mxu0 %v706
      %1194 = vmatprep.subr.mxu0 0.0
      %1195 = vmatpush2.msra.mxu0 0.0
      %1196 = vmatprep.subr.mxu0 0.0
      %1197 = vmatpush2.msra.mxu0 0.0
      %1198 = vmatprep.subr.mxu0 0.0
      %1199 = vmatpush2.msra.mxu0 0.0
      %1200 = vmatprep.subr.mxu0 0.0
      %1201 = vmatpush2.msra.mxu0 0.0
      %1202 = vmatprep.subr.mxu0 0.0
      %1203 = vmatpush2.msra.mxu0 0.0
      %1204 = vmatprep.subr.mxu0 0.0
      %1205 = vmatpush2.msra.mxu0 0.0
      %1206 = vmatprep.subr.mxu0 0.0
      %1207 = vmatpush2.msra.mxu0 0.0
      %1208 = vmatprep.subr.mxu0 0.0
      %1209 = vmatpush2.msra.mxu0 0.0
      %1210 = vmatprep.subr.mxu0 0.0
      %1211 = vmatpush2.msra.mxu0 0.0
      %1212 = vmatprep.subr.mxu0 0.0
      %1213 = vmatpush2.msra.mxu0 0.0
      %1214 = vmatprep.subr.mxu0 0.0
      %1215 = vmatpush2.msra.mxu0 0.0
      %1216 = vmatprep.subr.mxu0 0.0
      %1217 = vmatpush2.msra.mxu0 0.0
      %1218 = vmatprep.subr.mxu0 0.0
      %1219 = vmatpush2.msra.mxu0 0.0
      %1220 = vmatprep.subr.mxu0 0.0
      %1221 = vmatpush2.msra.mxu0 0.0
      %1222 = vmatprep.subr.mxu0 0.0
      %1223 = vmatpush2.msra.mxu0 0.0
      %1224 = vmatprep.subr.mxu0 0.0
      %1225 = vmatpush2.msra.mxu0 0.0
      %1226 = vmatprep.mubr.f32.mxu0 0.0
      %1227 = vmatmul.mubr.f32.gmra.mxu0 %v1160
      %v1228 = vpop.f32.mrf.mxu0
      %v1229 = vadd.f32 0.0, %v1228
      %v1230 = vpop.f32.mrf.mxu0
      %v1231 = vadd.f32 0.0, %v1230
      %1232 = vdwg.mxu0
      %1233 = vmatprep.subr.mxu0 0.0
      %1234 = vmatpush1.msra.mxu0 0.0
      %1235 = vmatprep.subr.mxu0 0.0
      %1236 = vmatpush1.msra.mxu0 0.0
      %1237 = vmatprep.subr.mxu0 0.0
      %1238 = vmatpush1.msra.mxu0 0.0
      %1239 = vmatprep.subr.mxu0 0.0
      %1240 = vmatpush1.msra.mxu0 0.0
      %1241 = vmatprep.subr.mxu0 0.0
      %1242 = vmatpush1.msra.mxu0 0.0
      %1243 = vmatprep.subr.mxu0 0.0
      %1244 = vmatpush1.msra.mxu0 0.0
      %1245 = vmatprep.subr.mxu0 0.0
      %1246 = vmatpush1.msra.mxu0 0.0
      %1247 = vmatprep.subr.mxu0 0.0
      %1248 = vmatpush1.msra.mxu0 0.0
      %1249 = vmatprep.subr.mxu0 0.0
      %1250 = vmatpush1.msra.mxu0 0.0
      %1251 = vmatprep.subr.mxu0 0.0
      %1252 = vmatpush1.msra.mxu0 0.0
      %1253 = vmatprep.subr.mxu0 0.0
      %1254 = vmatpush1.msra.mxu0 0.0
      %1255 = vmatprep.subr.mxu0 0.0
      %1256 = vmatpush1.msra.mxu0 0.0
      %1257 = vmatprep.subr.mxu0 0.0
      %1258 = vmatpush1.msra.mxu0 0.0
      %1259 = vmatprep.subr.mxu0 0.0
      %1260 = vmatpush1.msra.mxu0 0.0
      %1261 = vmatprep.subr.mxu0 0.0
      %1262 = vmatpush1.msra.mxu0 0.0
      %1263 = vmatprep.subr.mxu0 %v715
      %1264 = vmatpush1.msra.mxu0 %v712
      %1265 = vmatprep.subr.mxu0 0.0
      %1266 = vmatpush2.msra.mxu0 0.0
      %1267 = vmatprep.subr.mxu0 0.0
      %1268 = vmatpush2.msra.mxu0 0.0
      %1269 = vmatprep.subr.mxu0 0.0
      %1270 = vmatpush2.msra.mxu0 0.0
      %1271 = vmatprep.subr.mxu0 0.0
      %1272 = vmatpush2.msra.mxu0 0.0
      %1273 = vmatprep.subr.mxu0 0.0
      %1274 = vmatpush2.msra.mxu0 0.0
      %1275 = vmatprep.subr.mxu0 0.0
      %1276 = vmatpush2.msra.mxu0 0.0
      %1277 = vmatprep.subr.mxu0 0.0
      %1278 = vmatpush2.msra.mxu0 0.0
      %1279 = vmatprep.subr.mxu0 0.0
      %1280 = vmatpush2.msra.mxu0 0.0
      %1281 = vmatprep.subr.mxu0 0.0
      %1282 = vmatpush2.msra.mxu0 0.0
      %1283 = vmatprep.subr.mxu0 0.0
      %1284 = vmatpush2.msra.mxu0 0.0
      %1285 = vmatprep.subr.mxu0 0.0
      %1286 = vmatpush2.msra.mxu0 0.0
      %1287 = vmatprep.subr.mxu0 0.0
      %1288 = vmatpush2.msra.mxu0 0.0
      %1289 = vmatprep.subr.mxu0 0.0
      %1290 = vmatpush2.msra.mxu0 0.0
      %1291 = vmatprep.subr.mxu0 0.0
      %1292 = vmatpush2.msra.mxu0 0.0
      %1293 = vmatprep.subr.mxu0 0.0
      %1294 = vmatpush2.msra.mxu0 0.0
      %1295 = vmatprep.subr.mxu0 0.0
      %1296 = vmatpush2.msra.mxu0 0.0
      %1297 = vmatprep.mubr.f32.mxu0 0.0
      %1298 = vmatmul.mubr.f32.gmra.mxu0 %v1160
      %v1299 = vpop.f32.mrf.mxu0
      %v1300 = vadd.f32 0.0, %v1299
      %v1301 = vpop.f32.mrf.mxu0
      %v1302 = vadd.f32 0.0, %v1301
      %1303 = vdwg.mxu0
      %v1304 = vadd.f32 %v1082, %v1229
      %v1305 = vadd.f32 %v1084, %v1231
      %v1306 = vadd.f32 %v1153, %v1300
      %v1307 = vadd.f32 %v1155, %v1302
      %s1308 = scalar_lea.vmem %s1, 48
      %v1309 = vld [vmem:[%s1308] sm:$0xff]
      %s1310 = scalar_lea.vmem %s1, 56
      %v1311 = vld [vmem:[%s1310] sm:$0xff]
      %v1313 = vsel %vm388, %v1311, 0
      %1315 = vmatprep.subr.mxu0 0.0
      %1316 = vmatpush1.msra.mxu0 0.0
      %1317 = vmatprep.subr.mxu0 0.0
      %1318 = vmatpush1.msra.mxu0 0.0
      %1319 = vmatprep.subr.mxu0 0.0
      %1320 = vmatpush1.msra.mxu0 0.0
      %1321 = vmatprep.subr.mxu0 0.0
      %1322 = vmatpush1.msra.mxu0 0.0
      %1323 = vmatprep.subr.mxu0 0.0
      %1324 = vmatpush1.msra.mxu0 0.0
      %1325 = vmatprep.subr.mxu0 0.0
      %1326 = vmatpush1.msra.mxu0 0.0
      %1327 = vmatprep.subr.mxu0 0.0
      %1328 = vmatpush1.msra.mxu0 0.0
      %1329 = vmatprep.subr.mxu0 0.0
      %1330 = vmatpush1.msra.mxu0 0.0
      %1331 = vmatprep.subr.mxu0 0.0
      %1332 = vmatpush1.msra.mxu0 0.0
      %1333 = vmatprep.subr.mxu0 0.0
      %1334 = vmatpush1.msra.mxu0 0.0
      %1335 = vmatprep.subr.mxu0 0.0
      %1336 = vmatpush1.msra.mxu0 0.0
      %1337 = vmatprep.subr.mxu0 0.0
      %1338 = vmatpush1.msra.mxu0 0.0
      %1339 = vmatprep.subr.mxu0 0.0
      %1340 = vmatpush1.msra.mxu0 0.0
      %1341 = vmatprep.subr.mxu0 0.0
      %1342 = vmatpush1.msra.mxu0 0.0
      %1343 = vmatprep.subr.mxu0 0.0
      %1344 = vmatpush1.msra.mxu0 0.0
      %1345 = vmatprep.subr.mxu0 %v395
      %1346 = vmatpush1.msra.mxu0 %v393
      %1347 = vmatprep.subr.mxu0 0.0
      %1348 = vmatpush2.msra.mxu0 0.0
      %1349 = vmatprep.subr.mxu0 0.0
      %1350 = vmatpush2.msra.mxu0 0.0
      %1351 = vmatprep.subr.mxu0 0.0
      %1352 = vmatpush2.msra.mxu0 0.0
      %1353 = vmatprep.subr.mxu0 0.0
      %1354 = vmatpush2.msra.mxu0 0.0
      %1355 = vmatprep.subr.mxu0 0.0
      %1356 = vmatpush2.msra.mxu0 0.0
      %1357 = vmatprep.subr.mxu0 0.0
      %1358 = vmatpush2.msra.mxu0 0.0
      %1359 = vmatprep.subr.mxu0 0.0
      %1360 = vmatpush2.msra.mxu0 0.0
      %1361 = vmatprep.subr.mxu0 0.0
      %1362 = vmatpush2.msra.mxu0 0.0
      %1363 = vmatprep.subr.mxu0 0.0
      %1364 = vmatpush2.msra.mxu0 0.0
      %1365 = vmatprep.subr.mxu0 0.0
      %1366 = vmatpush2.msra.mxu0 0.0
      %1367 = vmatprep.subr.mxu0 0.0
      %1368 = vmatpush2.msra.mxu0 0.0
      %1369 = vmatprep.subr.mxu0 0.0
      %1370 = vmatpush2.msra.mxu0 0.0
      %1371 = vmatprep.subr.mxu0 0.0
      %1372 = vmatpush2.msra.mxu0 0.0
      %1373 = vmatprep.subr.mxu0 0.0
      %1374 = vmatpush2.msra.mxu0 0.0
      %1375 = vmatprep.subr.mxu0 0.0
      %1376 = vmatpush2.msra.mxu0 0.0
      %1377 = vmatprep.subr.mxu0 0.0
      %1378 = vmatpush2.msra.mxu0 0.0
      %1379 = vmatprep.mubr.f32.mxu0 0.0
      %1380 = vmatmul.mubr.f32.gmra.mxu0 %v1313
      %v1381 = vpop.f32.mrf.mxu0
      %v1382 = vadd.f32 0.0, %v1381
      %v1383 = vpop.f32.mrf.mxu0
      %v1384 = vadd.f32 0.0, %v1383
      %1385 = vdwg.mxu0
      %1386 = vmatprep.subr.mxu0 0.0
      %1387 = vmatpush1.msra.mxu0 0.0
      %1388 = vmatprep.subr.mxu0 0.0
      %1389 = vmatpush1.msra.mxu0 0.0
      %1390 = vmatprep.subr.mxu0 0.0
      %1391 = vmatpush1.msra.mxu0 0.0
      %1392 = vmatprep.subr.mxu0 0.0
      %1393 = vmatpush1.msra.mxu0 0.0
      %1394 = vmatprep.subr.mxu0 0.0
      %1395 = vmatpush1.msra.mxu0 0.0
      %1396 = vmatprep.subr.mxu0 0.0
      %1397 = vmatpush1.msra.mxu0 0.0
      %1398 = vmatprep.subr.mxu0 0.0
      %1399 = vmatpush1.msra.mxu0 0.0
      %1400 = vmatprep.subr.mxu0 0.0
      %1401 = vmatpush1.msra.mxu0 0.0
      %1402 = vmatprep.subr.mxu0 0.0
      %1403 = vmatpush1.msra.mxu0 0.0
      %1404 = vmatprep.subr.mxu0 0.0
      %1405 = vmatpush1.msra.mxu0 0.0
      %1406 = vmatprep.subr.mxu0 0.0
      %1407 = vmatpush1.msra.mxu0 0.0
      %1408 = vmatprep.subr.mxu0 0.0
      %1409 = vmatpush1.msra.mxu0 0.0
      %1410 = vmatprep.subr.mxu0 0.0
      %1411 = vmatpush1.msra.mxu0 0.0
      %1412 = vmatprep.subr.mxu0 0.0
      %1413 = vmatpush1.msra.mxu0 0.0
      %1414 = vmatprep.subr.mxu0 0.0
      %1415 = vmatpush1.msra.mxu0 0.0
      %1416 = vmatprep.subr.mxu0 %v399
      %1417 = vmatpush1.msra.mxu0 %v397
      %1418 = vmatprep.subr.mxu0 0.0
      %1419 = vmatpush2.msra.mxu0 0.0
      %1420 = vmatprep.subr.mxu0 0.0
      %1421 = vmatpush2.msra.mxu0 0.0
      %1422 = vmatprep.subr.mxu0 0.0
      %1423 = vmatpush2.msra.mxu0 0.0
      %1424 = vmatprep.subr.mxu0 0.0
      %1425 = vmatpush2.msra.mxu0 0.0
      %1426 = vmatprep.subr.mxu0 0.0
      %1427 = vmatpush2.msra.mxu0 0.0
      %1428 = vmatprep.subr.mxu0 0.0
      %1429 = vmatpush2.msra.mxu0 0.0
      %1430 = vmatprep.subr.mxu0 0.0
      %1431 = vmatpush2.msra.mxu0 0.0
      %1432 = vmatprep.subr.mxu0 0.0
      %1433 = vmatpush2.msra.mxu0 0.0
      %1434 = vmatprep.subr.mxu0 0.0
      %1435 = vmatpush2.msra.mxu0 0.0
      %1436 = vmatprep.subr.mxu0 0.0
      %1437 = vmatpush2.msra.mxu0 0.0
      %1438 = vmatprep.subr.mxu0 0.0
      %1439 = vmatpush2.msra.mxu0 0.0
      %1440 = vmatprep.subr.mxu0 0.0
      %1441 = vmatpush2.msra.mxu0 0.0
      %1442 = vmatprep.subr.mxu0 0.0
      %1443 = vmatpush2.msra.mxu0 0.0
      %1444 = vmatprep.subr.mxu0 0.0
      %1445 = vmatpush2.msra.mxu0 0.0
      %1446 = vmatprep.subr.mxu0 0.0
      %1447 = vmatpush2.msra.mxu0 0.0
      %1448 = vmatprep.subr.mxu0 0.0
      %1449 = vmatpush2.msra.mxu0 0.0
      %1450 = vmatprep.mubr.f32.mxu0 0.0
      %1451 = vmatmul.mubr.f32.gmra.mxu0 %v1313
      %v1452 = vpop.f32.mrf.mxu0
      %v1453 = vadd.f32 0.0, %v1452
      %v1454 = vpop.f32.mrf.mxu0
      %v1455 = vadd.f32 0.0, %v1454
      %1456 = vdwg.mxu0
      %v1458 = vsel %vm388, %v1309, 0
      %1460 = vmatprep.subr.mxu0 0.0
      %1461 = vmatpush1.msra.mxu0 0.0
      %1462 = vmatprep.subr.mxu0 0.0
      %1463 = vmatpush1.msra.mxu0 0.0
      %1464 = vmatprep.subr.mxu0 0.0
      %1465 = vmatpush1.msra.mxu0 0.0
      %1466 = vmatprep.subr.mxu0 0.0
      %1467 = vmatpush1.msra.mxu0 0.0
      %1468 = vmatprep.subr.mxu0 0.0
      %1469 = vmatpush1.msra.mxu0 0.0
      %1470 = vmatprep.subr.mxu0 0.0
      %1471 = vmatpush1.msra.mxu0 0.0
      %1472 = vmatprep.subr.mxu0 0.0
      %1473 = vmatpush1.msra.mxu0 0.0
      %1474 = vmatprep.subr.mxu0 0.0
      %1475 = vmatpush1.msra.mxu0 0.0
      %1476 = vmatprep.subr.mxu0 0.0
      %1477 = vmatpush1.msra.mxu0 0.0
      %1478 = vmatprep.subr.mxu0 0.0
      %1479 = vmatpush1.msra.mxu0 0.0
      %1480 = vmatprep.subr.mxu0 0.0
      %1481 = vmatpush1.msra.mxu0 0.0
      %1482 = vmatprep.subr.mxu0 0.0
      %1483 = vmatpush1.msra.mxu0 0.0
      %1484 = vmatprep.subr.mxu0 0.0
      %1485 = vmatpush1.msra.mxu0 0.0
      %1486 = vmatprep.subr.mxu0 0.0
      %1487 = vmatpush1.msra.mxu0 0.0
      %1488 = vmatprep.subr.mxu0 0.0
      %1489 = vmatpush1.msra.mxu0 0.0
      %1490 = vmatprep.subr.mxu0 %v550
      %1491 = vmatpush1.msra.mxu0 %v547
      %1492 = vmatprep.subr.mxu0 0.0
      %1493 = vmatpush2.msra.mxu0 0.0
      %1494 = vmatprep.subr.mxu0 0.0
      %1495 = vmatpush2.msra.mxu0 0.0
      %1496 = vmatprep.subr.mxu0 0.0
      %1497 = vmatpush2.msra.mxu0 0.0
      %1498 = vmatprep.subr.mxu0 0.0
      %1499 = vmatpush2.msra.mxu0 0.0
      %1500 = vmatprep.subr.mxu0 0.0
      %1501 = vmatpush2.msra.mxu0 0.0
      %1502 = vmatprep.subr.mxu0 0.0
      %1503 = vmatpush2.msra.mxu0 0.0
      %1504 = vmatprep.subr.mxu0 0.0
      %1505 = vmatpush2.msra.mxu0 0.0
      %1506 = vmatprep.subr.mxu0 0.0
      %1507 = vmatpush2.msra.mxu0 0.0
      %1508 = vmatprep.subr.mxu0 0.0
      %1509 = vmatpush2.msra.mxu0 0.0
      %1510 = vmatprep.subr.mxu0 0.0
      %1511 = vmatpush2.msra.mxu0 0.0
      %1512 = vmatprep.subr.mxu0 0.0
      %1513 = vmatpush2.msra.mxu0 0.0
      %1514 = vmatprep.subr.mxu0 0.0
      %1515 = vmatpush2.msra.mxu0 0.0
      %1516 = vmatprep.subr.mxu0 0.0
      %1517 = vmatpush2.msra.mxu0 0.0
      %1518 = vmatprep.subr.mxu0 0.0
      %1519 = vmatpush2.msra.mxu0 0.0
      %1520 = vmatprep.subr.mxu0 0.0
      %1521 = vmatpush2.msra.mxu0 0.0
      %1522 = vmatprep.subr.mxu0 0.0
      %1523 = vmatpush2.msra.mxu0 0.0
      %1524 = vmatprep.mubr.f32.mxu0 0.0
      %1525 = vmatmul.mubr.f32.gmra.mxu0 %v1458
      %v1526 = vpop.f32.mrf.mxu0
      %v1527 = vadd.f32 %v1382, %v1526
      %v1528 = vpop.f32.mrf.mxu0
      %v1529 = vadd.f32 %v1384, %v1528
      %1530 = vdwg.mxu0
      %1531 = vmatprep.subr.mxu0 0.0
      %1532 = vmatpush1.msra.mxu0 0.0
      %1533 = vmatprep.subr.mxu0 0.0
      %1534 = vmatpush1.msra.mxu0 0.0
      %1535 = vmatprep.subr.mxu0 0.0
      %1536 = vmatpush1.msra.mxu0 0.0
      %1537 = vmatprep.subr.mxu0 0.0
      %1538 = vmatpush1.msra.mxu0 0.0
      %1539 = vmatprep.subr.mxu0 0.0
      %1540 = vmatpush1.msra.mxu0 0.0
      %1541 = vmatprep.subr.mxu0 0.0
      %1542 = vmatpush1.msra.mxu0 0.0
      %1543 = vmatprep.subr.mxu0 0.0
      %1544 = vmatpush1.msra.mxu0 0.0
      %1545 = vmatprep.subr.mxu0 0.0
      %1546 = vmatpush1.msra.mxu0 0.0
      %1547 = vmatprep.subr.mxu0 0.0
      %1548 = vmatpush1.msra.mxu0 0.0
      %1549 = vmatprep.subr.mxu0 0.0
      %1550 = vmatpush1.msra.mxu0 0.0
      %1551 = vmatprep.subr.mxu0 0.0
      %1552 = vmatpush1.msra.mxu0 0.0
      %1553 = vmatprep.subr.mxu0 0.0
      %1554 = vmatpush1.msra.mxu0 0.0
      %1555 = vmatprep.subr.mxu0 0.0
      %1556 = vmatpush1.msra.mxu0 0.0
      %1557 = vmatprep.subr.mxu0 0.0
      %1558 = vmatpush1.msra.mxu0 0.0
      %1559 = vmatprep.subr.mxu0 0.0
      %1560 = vmatpush1.msra.mxu0 0.0
      %1561 = vmatprep.subr.mxu0 %v556
      %1562 = vmatpush1.msra.mxu0 %v553
      %1563 = vmatprep.subr.mxu0 0.0
      %1564 = vmatpush2.msra.mxu0 0.0
      %1565 = vmatprep.subr.mxu0 0.0
      %1566 = vmatpush2.msra.mxu0 0.0
      %1567 = vmatprep.subr.mxu0 0.0
      %1568 = vmatpush2.msra.mxu0 0.0
      %1569 = vmatprep.subr.mxu0 0.0
      %1570 = vmatpush2.msra.mxu0 0.0
      %1571 = vmatprep.subr.mxu0 0.0
      %1572 = vmatpush2.msra.mxu0 0.0
      %1573 = vmatprep.subr.mxu0 0.0
      %1574 = vmatpush2.msra.mxu0 0.0
      %1575 = vmatprep.subr.mxu0 0.0
      %1576 = vmatpush2.msra.mxu0 0.0
      %1577 = vmatprep.subr.mxu0 0.0
      %1578 = vmatpush2.msra.mxu0 0.0
      %1579 = vmatprep.subr.mxu0 0.0
      %1580 = vmatpush2.msra.mxu0 0.0
      %1581 = vmatprep.subr.mxu0 0.0
      %1582 = vmatpush2.msra.mxu0 0.0
      %1583 = vmatprep.subr.mxu0 0.0
      %1584 = vmatpush2.msra.mxu0 0.0
      %1585 = vmatprep.subr.mxu0 0.0
      %1586 = vmatpush2.msra.mxu0 0.0
      %1587 = vmatprep.subr.mxu0 0.0
      %1588 = vmatpush2.msra.mxu0 0.0
      %1589 = vmatprep.subr.mxu0 0.0
      %1590 = vmatpush2.msra.mxu0 0.0
      %1591 = vmatprep.subr.mxu0 0.0
      %1592 = vmatpush2.msra.mxu0 0.0
      %1593 = vmatprep.subr.mxu0 0.0
      %1594 = vmatpush2.msra.mxu0 0.0
      %1595 = vmatprep.mubr.f32.mxu0 0.0
      %1596 = vmatmul.mubr.f32.gmra.mxu0 %v1458
      %v1597 = vpop.f32.mrf.mxu0
      %v1598 = vadd.f32 %v1453, %v1597
      %v1599 = vpop.f32.mrf.mxu0
      %v1600 = vadd.f32 %v1455, %v1599
      %1601 = vdwg.mxu0
      %s1602 = scalar_lea.vmem %s1, 64
      %v1603 = vld [vmem:[%s1602] sm:$0xff]
      %v1605 = vsel %vm388, %v1603, 0
      %1607 = vmatprep.subr.mxu0 0.0
      %1608 = vmatpush1.msra.mxu0 0.0
      %1609 = vmatprep.subr.mxu0 0.0
      %1610 = vmatpush1.msra.mxu0 0.0
      %1611 = vmatprep.subr.mxu0 0.0
      %1612 = vmatpush1.msra.mxu0 0.0
      %1613 = vmatprep.subr.mxu0 0.0
      %1614 = vmatpush1.msra.mxu0 0.0
      %1615 = vmatprep.subr.mxu0 0.0
      %1616 = vmatpush1.msra.mxu0 0.0
      %1617 = vmatprep.subr.mxu0 0.0
      %1618 = vmatpush1.msra.mxu0 0.0
      %1619 = vmatprep.subr.mxu0 0.0
      %1620 = vmatpush1.msra.mxu0 0.0
      %1621 = vmatprep.subr.mxu0 0.0
      %1622 = vmatpush1.msra.mxu0 0.0
      %1623 = vmatprep.subr.mxu0 0.0
      %1624 = vmatpush1.msra.mxu0 0.0
      %1625 = vmatprep.subr.mxu0 0.0
      %1626 = vmatpush1.msra.mxu0 0.0
      %1627 = vmatprep.subr.mxu0 0.0
      %1628 = vmatpush1.msra.mxu0 0.0
      %1629 = vmatprep.subr.mxu0 0.0
      %1630 = vmatpush1.msra.mxu0 0.0
      %1631 = vmatprep.subr.mxu0 0.0
      %1632 = vmatpush1.msra.mxu0 0.0
      %1633 = vmatprep.subr.mxu0 0.0
      %1634 = vmatpush1.msra.mxu0 0.0
      %1635 = vmatprep.subr.mxu0 0.0
      %1636 = vmatpush1.msra.mxu0 0.0
      %1637 = vmatprep.subr.mxu0 %v709
      %1638 = vmatpush1.msra.mxu0 %v706
      %1639 = vmatprep.subr.mxu0 0.0
      %1640 = vmatpush2.msra.mxu0 0.0
      %1641 = vmatprep.subr.mxu0 0.0
      %1642 = vmatpush2.msra.mxu0 0.0
      %1643 = vmatprep.subr.mxu0 0.0
      %1644 = vmatpush2.msra.mxu0 0.0
      %1645 = vmatprep.subr.mxu0 0.0
      %1646 = vmatpush2.msra.mxu0 0.0
      %1647 = vmatprep.subr.mxu0 0.0
      %1648 = vmatpush2.msra.mxu0 0.0
      %1649 = vmatprep.subr.mxu0 0.0
      %1650 = vmatpush2.msra.mxu0 0.0
      %1651 = vmatprep.subr.mxu0 0.0
      %1652 = vmatpush2.msra.mxu0 0.0
      %1653 = vmatprep.subr.mxu0 0.0
      %1654 = vmatpush2.msra.mxu0 0.0
      %1655 = vmatprep.subr.mxu0 0.0
      %1656 = vmatpush2.msra.mxu0 0.0
      %1657 = vmatprep.subr.mxu0 0.0
      %1658 = vmatpush2.msra.mxu0 0.0
      %1659 = vmatprep.subr.mxu0 0.0
      %1660 = vmatpush2.msra.mxu0 0.0
      %1661 = vmatprep.subr.mxu0 0.0
      %1662 = vmatpush2.msra.mxu0 0.0
      %1663 = vmatprep.subr.mxu0 0.0
      %1664 = vmatpush2.msra.mxu0 0.0
      %1665 = vmatprep.subr.mxu0 0.0
      %1666 = vmatpush2.msra.mxu0 0.0
      %1667 = vmatprep.subr.mxu0 0.0
      %1668 = vmatpush2.msra.mxu0 0.0
      %1669 = vmatprep.subr.mxu0 0.0
      %1670 = vmatpush2.msra.mxu0 0.0
      %1671 = vmatprep.mubr.f32.mxu0 0.0
      %1672 = vmatmul.mubr.f32.gmra.mxu0 %v1605
      %v1673 = vpop.f32.mrf.mxu0
      %v1674 = vadd.f32 0.0, %v1673
      %v1675 = vpop.f32.mrf.mxu0
      %v1676 = vadd.f32 0.0, %v1675
      %1677 = vdwg.mxu0
      %1678 = vmatprep.subr.mxu0 0.0
      %1679 = vmatpush1.msra.mxu0 0.0
      %1680 = vmatprep.subr.mxu0 0.0
      %1681 = vmatpush1.msra.mxu0 0.0
      %1682 = vmatprep.subr.mxu0 0.0
      %1683 = vmatpush1.msra.mxu0 0.0
      %1684 = vmatprep.subr.mxu0 0.0
      %1685 = vmatpush1.msra.mxu0 0.0
      %1686 = vmatprep.subr.mxu0 0.0
      %1687 = vmatpush1.msra.mxu0 0.0
      %1688 = vmatprep.subr.mxu0 0.0
      %1689 = vmatpush1.msra.mxu0 0.0
      %1690 = vmatprep.subr.mxu0 0.0
      %1691 = vmatpush1.msra.mxu0 0.0
      %1692 = vmatprep.subr.mxu0 0.0
      %1693 = vmatpush1.msra.mxu0 0.0
      %1694 = vmatprep.subr.mxu0 0.0
      %1695 = vmatpush1.msra.mxu0 0.0
      %1696 = vmatprep.subr.mxu0 0.0
      %1697 = vmatpush1.msra.mxu0 0.0
      %1698 = vmatprep.subr.mxu0 0.0
      %1699 = vmatpush1.msra.mxu0 0.0
      %1700 = vmatprep.subr.mxu0 0.0
      %1701 = vmatpush1.msra.mxu0 0.0
      %1702 = vmatprep.subr.mxu0 0.0
      %1703 = vmatpush1.msra.mxu0 0.0
      %1704 = vmatprep.subr.mxu0 0.0
      %1705 = vmatpush1.msra.mxu0 0.0
      %1706 = vmatprep.subr.mxu0 0.0
      %1707 = vmatpush1.msra.mxu0 0.0
      %1708 = vmatprep.subr.mxu0 %v715
      %1709 = vmatpush1.msra.mxu0 %v712
      %1710 = vmatprep.subr.mxu0 0.0
      %1711 = vmatpush2.msra.mxu0 0.0
      %1712 = vmatprep.subr.mxu0 0.0
      %1713 = vmatpush2.msra.mxu0 0.0
      %1714 = vmatprep.subr.mxu0 0.0
      %1715 = vmatpush2.msra.mxu0 0.0
      %1716 = vmatprep.subr.mxu0 0.0
      %1717 = vmatpush2.msra.mxu0 0.0
      %1718 = vmatprep.subr.mxu0 0.0
      %1719 = vmatpush2.msra.mxu0 0.0
      %1720 = vmatprep.subr.mxu0 0.0
      %1721 = vmatpush2.msra.mxu0 0.0
      %1722 = vmatprep.subr.mxu0 0.0
      %1723 = vmatpush2.msra.mxu0 0.0
      %1724 = vmatprep.subr.mxu0 0.0
      %1725 = vmatpush2.msra.mxu0 0.0
      %1726 = vmatprep.subr.mxu0 0.0
      %1727 = vmatpush2.msra.mxu0 0.0
      %1728 = vmatprep.subr.mxu0 0.0
      %1729 = vmatpush2.msra.mxu0 0.0
      %1730 = vmatprep.subr.mxu0 0.0
      %1731 = vmatpush2.msra.mxu0 0.0
      %1732 = vmatprep.subr.mxu0 0.0
      %1733 = vmatpush2.msra.mxu0 0.0
      %1734 = vmatprep.subr.mxu0 0.0
      %1735 = vmatpush2.msra.mxu0 0.0
      %1736 = vmatprep.subr.mxu0 0.0
      %1737 = vmatpush2.msra.mxu0 0.0
      %1738 = vmatprep.subr.mxu0 0.0
      %1739 = vmatpush2.msra.mxu0 0.0
      %1740 = vmatprep.subr.mxu0 0.0
      %1741 = vmatpush2.msra.mxu0 0.0
      %1742 = vmatprep.mubr.f32.mxu0 0.0
      %1743 = vmatmul.mubr.f32.gmra.mxu0 %v1605
      %v1744 = vpop.f32.mrf.mxu0
      %v1745 = vadd.f32 0.0, %v1744
      %v1746 = vpop.f32.mrf.mxu0
      %v1747 = vadd.f32 0.0, %v1746
      %1748 = vdwg.mxu0
      %v1749 = vadd.f32 %v1527, %v1674
      %v1750 = vadd.f32 %v1529, %v1676
      %v1751 = vadd.f32 %v1598, %v1745
      %v1752 = vadd.f32 %v1600, %v1747
      %1753 = vrot.lane.b32.xlu0 %v859, 16
      %v1754 = vpop.permute.xlu0 %1753
      %1755 = vrot.lane.b32.xlu0 %v860, 16
      %v1756 = vpop.permute.xlu0 %1755
      %1757 = vrot.lane.b32.xlu0 %v861, 16
      %v1758 = vpop.permute.xlu0 %1757
      %1759 = vrot.lane.b32.xlu0 %v862, 16
      %v1760 = vpop.permute.xlu0 %1759
      %vm1761 = vcmp.lt.s32.totalorder %v285, 16
      %v1762 = vsel %vm1761, %v1758, %v1760
      %v1763 = vsel %vm1761, %v1756, %v1758
      %v1764 = vsel %vm1761, %v1754, %v1756
      %v1765 = vsel %vm1761, %v1760, %v1754
      %v1766 = vsel %vm269, 1, 0
      %v1767 = vlaneseq
      %v1768 = vshrl.u32 %v1767, 7
      %v1769 = vsub.s32 0, %v1768
      %v1770 = vrot.slane %v1766, %v1769
      %v1771 = vlaneseq
      %v1772 = vshrl.u32 %v1771, 7
      %v1773 = vsub.s32 2, %v1772
      %v1774 = vrot.slane %v1766, %v1773
      %v1775 = vlaneseq
      %v1776 = vshrl.u32 %v1775, 7
      %v1777 = vsub.s32 4, %v1776
      %v1778 = vrot.slane %v1766, %v1777
      %v1779 = vlaneseq
      %v1780 = vshrl.u32 %v1779, 7
      %v1781 = vsub.s32 6, %v1780
      %v1782 = vrot.slane %v1766, %v1781
      %v1783 = vlaneseq
      %v1784 = vshrl.u32 %v1783, 7
      %v1785 = vsub.s32 0, %v1784
      %v1786 = vrot.slane %v1770, %v1785
      %v1787 = vlaneseq
      %v1788 = vshrl.u32 %v1787, 7
      %v1789 = vsub.s32 0, %v1788
      %v1790 = vrot.slane %v1774, %v1789
      %v1791 = vlaneseq
      %v1792 = vshrl.u32 %v1791, 7
      %v1793 = vsub.s32 0, %v1792
      %v1794 = vrot.slane %v1778, %v1793
      %v1795 = vlaneseq
      %v1796 = vshrl.u32 %v1795, 7
      %v1797 = vsub.s32 0, %v1796
      %v1798 = vrot.slane %v1782, %v1797
      %vm1799 = vcmp.eq.s32.totalorder %v1786, 1
      %vm1800 = vcmp.eq.s32.totalorder %v1790, 1
      %vm1801 = vcmp.eq.s32.totalorder %v1794, 1
      %vm1802 = vcmp.eq.s32.totalorder %v1798, 1
      %v1803 = vsel %vm1799, %v1765, 0.0
      %v1804 = vsel %vm1800, %v1764, 0.0
      %v1805 = vsel %vm1801, %v1763, 0.0
      %v1806 = vsel %vm1802, %v1762, 0.0
      %v1807 = vadd.f32 %v1304, %v1803
      %v1808 = vadd.f32 %v1305, %v1804
      %v1809 = vadd.f32 %v1306, %v1805
      %v1810 = vadd.f32 %v1307, %v1806
      %1811 = vrot.lane.b32.xlu0 %v1749, 112
      %v1812 = vpop.permute.xlu0 %1811
      %1813 = vrot.lane.b32.xlu0 %v1750, 112
      %v1814 = vpop.permute.xlu0 %1813
      %1815 = vrot.lane.b32.xlu0 %v1751, 112
      %v1816 = vpop.permute.xlu0 %1815
      %1817 = vrot.lane.b32.xlu0 %v1752, 112
      %v1818 = vpop.permute.xlu0 %1817
      %vm1819 = vcmp.lt.s32.totalorder %v285, 112
      %v1820 = vsel %vm1819, %v1816, %v1818
      %v1821 = vsel %vm1819, %v1814, %v1816
      %v1822 = vsel %vm1819, %v1812, %v1814
      %v1823 = vsel %vm1819, %v1818, %v1812
      %v1824 = vlaneseq
      %v1825 = vshrl.u32 %v1824, 7
      %v1826 = vsub.s32 1, %v1825
      %v1827 = vrot.slane %v1766, %v1826
      %v1828 = vlaneseq
      %v1829 = vshrl.u32 %v1828, 7
      %v1830 = vsub.s32 3, %v1829
      %v1831 = vrot.slane %v1766, %v1830
      %v1832 = vlaneseq
      %v1833 = vshrl.u32 %v1832, 7
      %v1834 = vsub.s32 5, %v1833
      %v1835 = vrot.slane %v1766, %v1834
      %v1836 = vlaneseq
      %v1837 = vshrl.u32 %v1836, 7
      %v1838 = vsub.s32 7, %v1837
      %v1839 = vrot.slane %v1766, %v1838
      %v1840 = vlaneseq
      %v1841 = vshrl.u32 %v1840, 7
      %v1842 = vsub.s32 1, %v1841
      %v1843 = vrot.slane %v1827, %v1842
      %v1844 = vlaneseq
      %v1845 = vshrl.u32 %v1844, 7
      %v1846 = vsub.s32 1, %v1845
      %v1847 = vrot.slane %v1831, %v1846
      %v1848 = vlaneseq
      %v1849 = vshrl.u32 %v1848, 7
      %v1850 = vsub.s32 1, %v1849
      %v1851 = vrot.slane %v1835, %v1850
      %v1852 = vlaneseq
      %v1853 = vshrl.u32 %v1852, 7
      %v1854 = vsub.s32 1, %v1853
      %v1855 = vrot.slane %v1839, %v1854
      %vm1856 = vcmp.eq.s32.totalorder %v1843, 1
      %vm1857 = vcmp.eq.s32.totalorder %v1847, 1
      %vm1858 = vcmp.eq.s32.totalorder %v1851, 1
      %vm1859 = vcmp.eq.s32.totalorder %v1855, 1
      %v1860 = vsel %vm1856, %v1822, 0.0
      %v1861 = vsel %vm1857, %v1821, 0.0
      %v1862 = vsel %vm1858, %v1820, 0.0
      %v1863 = vsel %vm1859, %v1823, 0.0
      %v1864 = vadd.f32 %v1807, %v1860
      %v1865 = vadd.f32 %v1808, %v1861
      %v1866 = vadd.f32 %v1809, %v1862
      %v1867 = vadd.f32 %v1810, %v1863
      %v1868 = vld [vmem:[%s4] sm:$0xff]
      %1870 = vset.pattern.permute.xlu0 0
      %1871 = vperm.xlu0 %1870, %v1868
      %v1872 = vpop.permute.xlu0 %1871
      %v1874 = vadd.f32 %v1864, %v1872
      %v1875 = vadd.f32 %v1865, %v1872
      %v1876 = vadd.f32 %v1866, %v1872
      %v1877 = vadd.f32 %v1867, %v1872
      %vm1878 = vcmp.gt.f32.partialorder %v1874, 0.0
      %vm1879 = vcmp.gt.f32.partialorder %v1875, 0.0
      %vm1880 = vcmp.gt.f32.partialorder %v1876, 0.0
      %vm1881 = vcmp.gt.f32.partialorder %v1877, 0.0
      %v1882 = vmul.f32 %v1874, 0.01
      %v1883 = vmul.f32 %v1875, 0.01
      %v1884 = vmul.f32 %v1876, 0.01
      %v1885 = vmul.f32 %v1877, 0.01
      %v1886 = vsel %vm1878, %v1874, %v1882
      %v1887 = vsel %vm1879, %v1875, %v1883
      %v1888 = vsel %vm1880, %v1876, %v1884
      %v1889 = vsel %vm1881, %v1877, %v1885
      %1890 = vst [vmem:[%s262] sm:$0xff] %v1886
      %1891 = vst [vmem:[%s262 + $0x8] sm:$0xff] %v1887
      %1892 = vst [vmem:[%s262 + $0x10] sm:$0xff] %v1888
      %1893 = vst [vmem:[%s262 + $0x18] sm:$0xff] %v1889
      %s1894 = smul.u32 4, %s21
      %p1895 = scmp.lt.s32.totalorder %s20, 1
      %s1896 = scalar_select %p1895, %s20, 1
      %p1897 = scmp.lt.s32.totalorder %s1894, 15
      %s1898 = scalar_select %p1897, %s1894, 15
      %s1899 = smul.addr %s1896, 16
      %s1900 = sadd.s32 %s1898, %s1899
      %s1901 = smul.addr %s1900, 8
      %s1902 = scalar_lea.vmem %s5, %s1901
      // Predicated region
      $region41: #{block3d_forward.1} parent=39 // pred_check
        %p1903 = pneg %p160
      $region42: #{block3d_forward.1} parent=39 // pred_check_branch
        %1905 = sbr.rel (%p1903) target = $region44
      $region43: #{block3d_forward.1} parent=39 // pred_region
        %s1906 = smul.u32 4, %s21
      $region44: #{block3d_forward.1} parent=39 // pred_fallthru
        _
    $region40: #{block3d_forward.1} parent=5 // pred_fallthru
      _
    %p1907 = scmp.le.s32.totalorder 2, %s11
    // Predicated region
    $region45: #{block3d_forward.1} parent=5 // pred_check
      %p1908 = pneg %p1907
    $region46: #{block3d_forward.1} parent=5 // pred_check_branch
      %1910 = sbr.rel (%p1908) target = $region48
    $region47: #{block3d_forward.1} parent=5 // pred_region
      %s1911 = ssub.s32 %s11, 2
      // Predicated region
      $region49: #{block3d_forward.1} parent=47 // pred_check
        %p1912 = pneg %p166
      $region50: #{block3d_forward.1} parent=47 // pred_check_branch
        %1914 = sbr.rel (%p1912) target = $region52
      $region51: #{block3d_forward.1} parent=47 // pred_region
        %s1915 = smul.u32 4, %s23
        %p1916 = scmp.lt.s32.totalorder %s22, 1
        %s1917 = scalar_select %p1916, %s22, 1
        %p1918 = scmp.lt.s32.totalorder %s1915, 15
        %s1919 = scalar_select %p1918, %s1915, 15
        %s1920 = smul.addr %s1917, 16
        %s1921 = sadd.s32 %s1919, %s1920
        %s1922 = smul.addr %s1921, 8
        %s1923 = scalar_lea.vmem %s5, %s1922
      $region52: #{block3d_forward.1} parent=47 // pred_fallthru
        _
    $region48: #{block3d_forward.1} parent=5 // pred_fallthru
      _
  $region6: #{block3d_forward.1} parent=0 // loop_footer
    %s15 = sadd.s32 1, %s11
  $region7: #{block3d_forward.1} parent=0 // loop_footer_branch
    %10 = sbr.rel target = $region3
  $region8: #{block3d_forward.1} parent=0 // loop_exit
    _

</llo_original>
